<compile_context>
chip_gen: v5e
topology: v5e:2x2
jax: 0.10.0
libtpu: 0.0.40
codegen_flags: <defaults>
</compile_context>

<pallas_src>
import functools

import jax
import jax.numpy as jnp
from jax import lax
from jax.experimental import pallas as pl
from jax.experimental.pallas import tpu as pltpu

EPS = 1e-5


def _round_up(x, m):
    return (x + m - 1) // m * m


def _physical_vmem_bytes():
    """Generation-aware physical VMEM (v5e/v6e: 128 MiB, v7x: 64 MiB)."""
    try:
        info = pltpu.get_tpu_info()
        v = getattr(info, "vmem_capacity_bytes", None)
        if v:
            return int(v)
    except Exception:
        pass
    return 64 * 1024 * 1024  # conservative fallback (v7x per-TC VMEM)


def _conv_stats_kernel(x_ref, w_ref, y_ref, sum_ref, sq_ref, *, k, s, th, wo, cin):
    """Phase 1: conv for one (sample, row-band) block + per-block channel stats."""
    x = x_ref[...]                                # (1, in_rows, Wp, Cin), mxu dtype
    cpad = y_ref.shape[-1]
    acc = jnp.zeros((th * wo, cpad), jnp.float32)
    # Sum over the k*k taps: each tap is a [th*wo, Cin] x [Cin, Cpad] MXU matmul
    # accumulated in f32.  (Unrolled at trace time: k*k is small.)
    # TODO(synk): for Cin < ~64 fold the k*k taps into the MXU contraction dim
    # (single [th*wo, k*k*Cin] x [k*k*Cin, Cpad] matmul) to avoid shallow-K
    # MXU pushes; kept per-tap here to stay on a proven lowering path.
    for kh in range(k):
        for kw in range(k):
            if s == 1:
                tap = x[:, kh:kh + th, kw:kw + wo, :]
            else:
                # TODO(synk): for s>1 pre-split the input into s*s spatial
                # phases in the wrapper so these reads are contiguous.
                tap = lax.slice(
                    x,
                    (0, kh, kw, 0),
                    (1, kh + (th - 1) * s + 1, kw + (wo - 1) * s + 1, cin),
                    (1, s, s, 1))
            acc += jnp.dot(tap.reshape(th * wo, cin), w_ref[kh, kw],
                           preferred_element_type=jnp.float32)

    # Flat, lane-dense store of the conv output block (bf16 by default).
    y_ref[...] = acc[None].astype(y_ref.dtype)
    # Per-block partial stats written to this step's own block (keeps the grid
    # axis "parallel" -> both v7x TensorCores busy); reduced later in XLA.
    sum_ref[...] = jnp.sum(acc, axis=0, keepdims=True)[None]
    sq_ref[...] = jnp.sum(acc * acc, axis=0, keepdims=True)[None]


def _bn_prelu_kernel(y_ref, scale_ref, shift_ref, alpha_ref, o_ref):
    """Phase 2: flat lane-dense (TM, Cpad) tile: y*scale + shift, then PReLU."""
    y = y_ref[...].astype(jnp.float32)            # upcast bf16 y (v5e: no bf16 VPU)
    z = y * scale_ref[...] + shift_ref[...]
    o_ref[...] = jnp.where(z >= 0, z, alpha_ref[...] * z).astype(o_ref.dtype)


def conv_block_nhwc(x, weight, gamma, beta, alpha, *, k, s, p, dw=False,
                    linear=False, mxu_dtype=jnp.bfloat16, y_dtype=jnp.bfloat16,
                    max_out_rows=None):
    """Fused Conv2d(bias=False) -> BatchNorm2d(batch stats) -> PReLU, NHWC in/out.

    x: [N, H, W, Cin] f32.  weight: [Cout, Cin, k, k] (PyTorch OIHW layout).
    Returns [N, Ho, Wo, Cout] f32.  max_out_rows caps the phase-1 row band
    (mostly for testing the tiled path on small images).
    """
    if dw:
        # TODO(synk): depthwise (groups=Cin) ConvBlock path not implemented.
        raise NotImplementedError("depthwise ConvBlock (dw=True) not implemented")

    N, H, W, Cin = x.shape
    Cout = weight.shape[0]
    Ho = (H + 2 * p - k) // s + 1
    Wo = (W + 2 * p - k) // s + 1
    Hp, Wp = H + 2 * p, W + 2 * p
    Cpad = _round_up(Cout, 128)                   # lane-dense output channels

    in_bytes = jnp.dtype(mxu_dtype).itemsize
    y_bytes = jnp.dtype(y_dtype).itemsize

    phys_vmem = _physical_vmem_bytes()
    vmem_limit = int(min(phys_vmem * 3 // 4, 96 * 1024 * 1024))
    budget = int(vmem_limit * 0.8)

    # ---- phase-1 row tiling: largest divisor of Ho whose block fits VMEM ----
    th = 1
    for cand in range(1, Ho + 1):
        if Ho % cand:
            continue
        if max_out_rows is not None and cand > max_out_rows:
            break
        in_rows_c = (cand - 1) * s + k
        est = (2 * in_rows_c * Wp * Cin * in_bytes     # double-buffered input band
               + 2 * k * k * Cin * Cpad * in_bytes     # double-buffered weights
               + 2 * cand * Wo * Cpad * y_bytes        # double-buffered y block
               + 3 * cand * Wo * Cpad * 4)             # f32 acc + tap-copy headroom
        if est <= budget:
            th = cand
    num_bands = Ho // th
    in_rows = (th - 1) * s + k

    # NHWC zero-pad (cheap). TODO(synk): for ConvBlock chains fuse this pad into
    # the phase-1 DMA (interior index_map + zeroed halo scratch).
    xp = jnp.pad(x, ((0, 0), (p, p), (p, p), (0, 0))).astype(mxu_dtype)

    if num_bands == 1:
        xb = xp[:, :in_rows]                                  # (N, in_rows, Wp, Cin)
    else:
        # Halo-duplicated row bands so phase-1 BlockSpecs stay non-overlapping.
        xb = jnp.concatenate(
            [xp[:, b * th * s: b * th * s + in_rows][:, None]
             for b in range(num_bands)], axis=1)              # (N, B, in_rows, Wp, Cin)
        xb = xb.reshape(N * num_bands, in_rows, Wp, Cin)
    G = N * num_bands

    # OIHW -> (k, k, Cin, Cpad), zero-padded along Cout.
    w = jnp.transpose(weight, (2, 3, 1, 0))
    w = jnp.pad(w, ((0, 0), (0, 0), (0, 0), (0, Cpad - Cout))).astype(mxu_dtype)

    kern1 = functools.partial(_conv_stats_kernel, k=k, s=s, th=th, wo=Wo, cin=Cin)
    y, psum, psq = pl.pallas_call(
        kern1,
        out_shape=(
            jax.ShapeDtypeStruct((G, th * Wo, Cpad), y_dtype),
            jax.ShapeDtypeStruct((G, 1, Cpad), jnp.float32),
            jax.ShapeDtypeStruct((G, 1, Cpad), jnp.float32),
        ),
        grid=(G,),
        in_specs=[
            pl.BlockSpec((1, in_rows, Wp, Cin), lambda g: (g, 0, 0, 0)),
            pl.BlockSpec((k, k, Cin, Cpad), lambda g: (0, 0, 0, 0)),
        ],
        out_specs=(
            pl.BlockSpec((1, th * Wo, Cpad), lambda g: (g, 0, 0)),
            pl.BlockSpec((1, 1, Cpad), lambda g: (g, 0, 0)),
            pl.BlockSpec((1, 1, Cpad), lambda g: (g, 0, 0)),
        ),
        compiler_params=pltpu.CompilerParams(
            dimension_semantics=("parallel",),       # per-block outputs -> shardable
            vmem_limit_bytes=vmem_limit),
    )(xb, w)

    # ---- tiny per-channel finalize in XLA (train-mode BN, biased variance) ----
    M = N * Ho * Wo
    ysum = jnp.sum(psum, axis=0)                     # (1, Cpad)
    ysq = jnp.sum(psq, axis=0)
    mean = ysum / M
    # NOTE: E[x^2] - mean^2 in f32 can cancel for huge M with |mean| >> std;
    # acceptable at ConvBlock activation scales (documented per review).
    var = jnp.maximum(ysq / M - mean * mean, 0.0)
    gpad = jnp.pad(gamma.astype(jnp.float32), (0, Cpad - Cout)).reshape(1, Cpad)
    bpad = jnp.pad(beta.astype(jnp.float32), (0, Cpad - Cout)).reshape(1, Cpad)
    scale = gpad * lax.rsqrt(var + EPS)
    shift = bpad - mean * scale
    if linear:
        apad = jnp.ones((1, Cpad), jnp.float32)      # identity PReLU
    else:
        apad = jnp.pad(alpha.astype(jnp.float32), (0, Cpad - Cout)).reshape(1, Cpad)

    # ---- phase 2: flat (M, Cpad) lane-dense normalize + affine + PReLU ----
    y2 = y.reshape(M, Cpad)                          # free reshape (leading dims merge)
    row_bytes = Cpad * (2 * y_bytes + 2 * 4)         # buffered in + out bytes per row
    tm = min(M, max(256, min(2048, budget // max(row_bytes, 1))))
    if tm < M:
        tm = max(256, (tm // 256) * 256)             # sublane-aligned row tile

    out = pl.pallas_call(
        _bn_prelu_kernel,
        out_shape=jax.ShapeDtypeStruct((M, Cpad), jnp.float32),
        grid=(pl.cdiv(M, tm),),
        in_specs=[
            pl.BlockSpec((tm, Cpad), lambda i: (i, 0)),
            pl.BlockSpec((1, Cpad), lambda i: (0, 0)),
            pl.BlockSpec((1, Cpad), lambda i: (0, 0)),
            pl.BlockSpec((1, Cpad), lambda i: (0, 0)),
        ],
        out_specs=pl.BlockSpec((tm, Cpad), lambda i: (i, 0)),
        compiler_params=pltpu.CompilerParams(
            dimension_semantics=("parallel",),
            vmem_limit_bytes=vmem_limit),
    )(y2, scale, shift, apad)

    return out.reshape(N, Ho, Wo, Cpad)[..., :Cout]


def conv_block(x, weight, gamma, beta, alpha, *, k, s, p, dw=False, linear=False,
               mxu_dtype=jnp.bfloat16, y_dtype=jnp.bfloat16, max_out_rows=None):
    """PyTorch-parity wrapper: NCHW in / NCHW out.

    For chains of ConvBlocks prefer conv_block_nhwc and stay in NHWC — the
    NCHW<->NHWC transposes here are pure layout traffic.
    """
    x_nhwc = jnp.transpose(x, (0, 2, 3, 1))
    out = conv_block_nhwc(x_nhwc, weight, gamma, beta, alpha, k=k, s=s, p=p,
                          dw=dw, linear=linear, mxu_dtype=mxu_dtype,
                          y_dtype=y_dtype, max_out_rows=max_out_rows)
    return jnp.transpose(out, (0, 3, 1, 2))


def _reference(x, weight, gamma, beta, alpha, *, k, s, p, linear=False):
    # Pure-JAX reference matching PyTorch ConvBlock.forward (train-mode BN).
    y = jax.lax.conv_general_dilated(
        x, weight, window_strides=(s, s), padding=[(p, p), (p, p)],
        dimension_numbers=("NCHW", "OIHW", "NCHW"))
    mean = jnp.mean(y, axis=(0, 2, 3), keepdims=True)
    var = jnp.mean((y - mean) ** 2, axis=(0, 2, 3), keepdims=True)
    z = (y - mean) * jax.lax.rsqrt(var + EPS)
    z = z * gamma.reshape(1, -1, 1, 1) + beta.reshape(1, -1, 1, 1)
    if linear:
        return z
    a = alpha.reshape(1, -1, 1, 1)
    return jnp.where(z >= 0, z, a * z)


if __name__ == "__main__":
    key = jax.random.PRNGKey(0)
    kx, kw, kg, kb, kw2 = jax.random.split(key, 5)

    N, Cin, H, W = 2, 4, 16, 16
    Cout, k, s, p = 8, 3, 1, 1
    x = jax.random.normal(kx, (N, Cin, H, W), jnp.float32)
    weight = jax.random.normal(kw, (Cout, Cin, k, k), jnp.float32) * 0.1
    gamma = jnp.ones((Cout,), jnp.float32)        # BatchNorm2d weight init
    beta = jnp.zeros((Cout,), jnp.float32)        # BatchNorm2d bias init
    alpha = jnp.full((Cout,), 0.25, jnp.float32)  # PReLU init

    ref = _reference(x, weight, gamma, beta, alpha, k=k, s=s, p=p, linear=False)

    # Test 1: ConvBlock(4->8, k=3, s=1, p=1) with PReLU, full f32 path (tight).
    out = conv_block(x, weight, gamma, beta, alpha, k=k, s=s, p=p, linear=False,
                     mxu_dtype=jnp.float32, y_dtype=jnp.float32)
    out = jax.block_until_ready(out)
    assert out.shape == (N, Cout, H, W)
    assert jnp.allclose(out, ref, atol=1e-4, rtol=1e-4), "mismatch (3x3 f32)"

    # Test 2: ConvBlock(4->16, k=1, s=1, p=0, linear=True) (no PReLU), f32.
    Cout2 = 16
    weight2 = jax.random.normal(kw2, (Cout2, Cin, 1, 1), jnp.float32) * 0.2
    gamma2 = 0.5 + jax.random.uniform(kg, (Cout2,), jnp.float32)
    beta2 = jax.random.normal(kb, (Cout2,), jnp.float32) * 0.1
    out2 = conv_block(x, weight2, gamma2, beta2, None, k=1, s=1, p=0, linear=True,
                      mxu_dtype=jnp.float32, y_dtype=jnp.float32)
    out2 = jax.block_until_ready(out2)
    ref2 = _reference(x, weight2, gamma2, beta2, None, k=1, s=1, p=0, linear=True)
    assert out2.shape == (N, Cout2, H, W)
    assert jnp.allclose(out2, ref2, atol=1e-4, rtol=1e-4), "mismatch (1x1 f32)"

    # Test 3: forced phase-1 row tiling (4 output rows / band -> 4 bands), f32.
    out3 = conv_block(x, weight, gamma, beta, alpha, k=k, s=s, p=p, linear=False,
                      mxu_dtype=jnp.float32, y_dtype=jnp.float32, max_out_rows=4)
    out3 = jax.block_until_ready(out3)
    assert jnp.allclose(out3, ref, atol=1e-4, rtol=1e-4), "mismatch (row-tiled f32)"

    # Test 4: default perf path (bf16 MXU operands + bf16 y intermediate).
    out4 = conv_block(x, weight, gamma, beta, alpha, k=k, s=s, p=p, linear=False)
    out4 = jax.block_until_ready(out4)
    assert jnp.allclose(out4, ref, atol=1e-1, rtol=1e-1), "mismatch (bf16 path)"

    print("KERNEL_OK")
</pallas_src>

<mosaic_0001>
module attributes {stable_mosaic.version = 11 : i64} {
  func.func @_conv_stats_kernel(%arg0: i32, %arg1: memref<1x18x18x4xf32, #tpu.memory_space<vmem>>, %arg2: memref<3x3x4x128xf32, #tpu.memory_space<vmem>>, %arg3: memref<1x256x128xf32, #tpu.memory_space<vmem>>, %arg4: memref<1x1x128xf32, #tpu.memory_space<vmem>>, %arg5: memref<1x1x128xf32, #tpu.memory_space<vmem>>) attributes {dimension_semantics = [#tpu.dimension_semantics<parallel>], iteration_bounds = array<i64: 2>, scalar_prefetch = 0 : i64, scratch_operands = 0 : i64, tpu.core_type = #tpu.core_type<tc>, window_params = [{transform_indices = @transform_0, window_bounds = array<i64: 1, 18, 18, 4>}, {pipeline_mode = #tpu.pipeline_mode<synchronous>, transform_indices = @transform_1, window_bounds = array<i64: 3, 3, 4, 128>}, {transform_indices = @transform_2, window_bounds = array<i64: 1, 256, 128>}, {transform_indices = @transform_3, window_bounds = array<i64: 1, 1, 128>}, {transform_indices = @transform_4, window_bounds = array<i64: 1, 1, 128>}]} {
    %c0 = arith.constant 0 : index
    %c0_0 = arith.constant 0 : index
    %c0_1 = arith.constant 0 : index
    %c0_2 = arith.constant 0 : index
    %0 = vector.load %arg1[%c0, %c0_0, %c0_1, %c0_2] : memref<1x18x18x4xf32, #tpu.memory_space<vmem>>, vector<1x18x18x4xf32>
    %cst = arith.constant 0.000000e+00 : f32
    %1 = vector.broadcast %cst : f32 to vector<256x128xf32>
    %2 = vector.extract_strided_slice %0 {offsets = [0, 0, 0, 0], sizes = [1, 16, 16, 4], strides = [1, 1, 1, 1]} : vector<1x18x18x4xf32> to vector<1x16x16x4xf32>
    %3 = vector.shape_cast %2 : vector<1x16x16x4xf32> to vector<256x4xf32>
    %c0_3 = arith.constant 0 : index
    %c0_4 = arith.constant 0 : index
    %c0_5 = arith.constant 0 : index
    %c0_6 = arith.constant 0 : index
    %4 = vector.load %arg2[%c0_3, %c0_4, %c0_5, %c0_6] : memref<3x3x4x128xf32, #tpu.memory_space<vmem>>, vector<1x1x4x128xf32>
    %5 = vector.shape_cast %4 : vector<1x1x4x128xf32> to vector<4x128xf32>
    %cst_7 = arith.constant dense<0.000000e+00> : vector<256x128xf32>
    %6 = tpu.matmul %3, %5, %cst_7 {dimension_numbers = #tpu.dot_dimension_numbers<[1], [0], [0], [1], [0, 0, 1, 1], [], []>} : vector<256x4xf32>, vector<4x128xf32>, vector<256x128xf32> -> vector<256x128xf32>
    %7 = arith.addf %1, %6 : vector<256x128xf32>
    %8 = vector.extract_strided_slice %0 {offsets = [0, 0, 1, 0], sizes = [1, 16, 16, 4], strides = [1, 1, 1, 1]} : vector<1x18x18x4xf32> to vector<1x16x16x4xf32>
    %9 = vector.shape_cast %8 : vector<1x16x16x4xf32> to vector<256x4xf32>
    %c0_8 = arith.constant 0 : index
    %c1 = arith.constant 1 : index
    %c0_9 = arith.constant 0 : index
    %c0_10 = arith.constant 0 : index
    %10 = vector.load %arg2[%c0_8, %c1, %c0_9, %c0_10] : memref<3x3x4x128xf32, #tpu.memory_space<vmem>>, vector<1x1x4x128xf32>
    %11 = vector.shape_cast %10 : vector<1x1x4x128xf32> to vector<4x128xf32>
    %cst_11 = arith.constant dense<0.000000e+00> : vector<256x128xf32>
    %12 = tpu.matmul %9, %11, %cst_11 {dimension_numbers = #tpu.dot_dimension_numbers<[1], [0], [0], [1], [0, 0, 1, 1], [], []>} : vector<256x4xf32>, vector<4x128xf32>, vector<256x128xf32> -> vector<256x128xf32>
    %13 = arith.addf %7, %12 : vector<256x128xf32>
    %14 = vector.extract_strided_slice %0 {offsets = [0, 0, 2, 0], sizes = [1, 16, 16, 4], strides = [1, 1, 1, 1]} : vector<1x18x18x4xf32> to vector<1x16x16x4xf32>
    %15 = vector.shape_cast %14 : vector<1x16x16x4xf32> to vector<256x4xf32>
    %c0_12 = arith.constant 0 : index
    %c2 = arith.constant 2 : index
    %c0_13 = arith.constant 0 : index
    %c0_14 = arith.constant 0 : index
    %16 = vector.load %arg2[%c0_12, %c2, %c0_13, %c0_14] : memref<3x3x4x128xf32, #tpu.memory_space<vmem>>, vector<1x1x4x128xf32>
    %17 = vector.shape_cast %16 : vector<1x1x4x128xf32> to vector<4x128xf32>
    %cst_15 = arith.constant dense<0.000000e+00> : vector<256x128xf32>
    %18 = tpu.matmul %15, %17, %cst_15 {dimension_numbers = #tpu.dot_dimension_numbers<[1], [0], [0], [1], [0, 0, 1, 1], [], []>} : vector<256x4xf32>, vector<4x128xf32>, vector<256x128xf32> -> vector<256x128xf32>
    %19 = arith.addf %13, %18 : vector<256x128xf32>
    %20 = vector.extract_strided_slice %0 {offsets = [0, 1, 0, 0], sizes = [1, 16, 16, 4], strides = [1, 1, 1, 1]} : vector<1x18x18x4xf32> to vector<1x16x16x4xf32>
    %21 = vector.shape_cast %20 : vector<1x16x16x4xf32> to vector<256x4xf32>
    %c1_16 = arith.constant 1 : index
    %c0_17 = arith.constant 0 : index
    %c0_18 = arith.constant 0 : index
    %c0_19 = arith.constant 0 : index
    %22 = vector.load %arg2[%c1_16, %c0_17, %c0_18, %c0_19] : memref<3x3x4x128xf32, #tpu.memory_space<vmem>>, vector<1x1x4x128xf32>
    %23 = vector.shape_cast %22 : vector<1x1x4x128xf32> to vector<4x128xf32>
    %cst_20 = arith.constant dense<0.000000e+00> : vector<256x128xf32>
    %24 = tpu.matmul %21, %23, %cst_20 {dimension_numbers = #tpu.dot_dimension_numbers<[1], [0], [0], [1], [0, 0, 1, 1], [], []>} : vector<256x4xf32>, vector<4x128xf32>, vector<256x128xf32> -> vector<256x128xf32>
    %25 = arith.addf %19, %24 : vector<256x128xf32>
    %26 = vector.extract_strided_slice %0 {offsets = [0, 1, 1, 0], sizes = [1, 16, 16, 4], strides = [1, 1, 1, 1]} : vector<1x18x18x4xf32> to vector<1x16x16x4xf32>
    %27 = vector.shape_cast %26 : vector<1x16x16x4xf32> to vector<256x4xf32>
    %c1_21 = arith.constant 1 : index
    %c1_22 = arith.constant 1 : index
    %c0_23 = arith.constant 0 : index
    %c0_24 = arith.constant 0 : index
    %28 = vector.load %arg2[%c1_21, %c1_22, %c0_23, %c0_24] : memref<3x3x4x128xf32, #tpu.memory_space<vmem>>, vector<1x1x4x128xf32>
    %29 = vector.shape_cast %28 : vector<1x1x4x128xf32> to vector<4x128xf32>
    %cst_25 = arith.constant dense<0.000000e+00> : vector<256x128xf32>
    %30 = tpu.matmul %27, %29, %cst_25 {dimension_numbers = #tpu.dot_dimension_numbers<[1], [0], [0], [1], [0, 0, 1, 1], [], []>} : vector<256x4xf32>, vector<4x128xf32>, vector<256x128xf32> -> vector<256x128xf32>
    %31 = arith.addf %25, %30 : vector<256x128xf32>
    %32 = vector.extract_strided_slice %0 {offsets = [0, 1, 2, 0], sizes = [1, 16, 16, 4], strides = [1, 1, 1, 1]} : vector<1x18x18x4xf32> to vector<1x16x16x4xf32>
    %33 = vector.shape_cast %32 : vector<1x16x16x4xf32> to vector<256x4xf32>
    %c1_26 = arith.constant 1 : index
    %c2_27 = arith.constant 2 : index
    %c0_28 = arith.constant 0 : index
    %c0_29 = arith.constant 0 : index
    %34 = vector.load %arg2[%c1_26, %c2_27, %c0_28, %c0_29] : memref<3x3x4x128xf32, #tpu.memory_space<vmem>>, vector<1x1x4x128xf32>
    %35 = vector.shape_cast %34 : vector<1x1x4x128xf32> to vector<4x128xf32>
    %cst_30 = arith.constant dense<0.000000e+00> : vector<256x128xf32>
    %36 = tpu.matmul %33, %35, %cst_30 {dimension_numbers = #tpu.dot_dimension_numbers<[1], [0], [0], [1], [0, 0, 1, 1], [], []>} : vector<256x4xf32>, vector<4x128xf32>, vector<256x128xf32> -> vector<256x128xf32>
    %37 = arith.addf %31, %36 : vector<256x128xf32>
    %38 = vector.extract_strided_slice %0 {offsets = [0, 2, 0, 0], sizes = [1, 16, 16, 4], strides = [1, 1, 1, 1]} : vector<1x18x18x4xf32> to vector<1x16x16x4xf32>
    %39 = vector.shape_cast %38 : vector<1x16x16x4xf32> to vector<256x4xf32>
    %c2_31 = arith.constant 2 : index
    %c0_32 = arith.constant 0 : index
    %c0_33 = arith.constant 0 : index
    %c0_34 = arith.constant 0 : index
    %40 = vector.load %arg2[%c2_31, %c0_32, %c0_33, %c0_34] : memref<3x3x4x128xf32, #tpu.memory_space<vmem>>, vector<1x1x4x128xf32>
    %41 = vector.shape_cast %40 : vector<1x1x4x128xf32> to vector<4x128xf32>
    %cst_35 = arith.constant dense<0.000000e+00> : vector<256x128xf32>
    %42 = tpu.matmul %39, %41, %cst_35 {dimension_numbers = #tpu.dot_dimension_numbers<[1], [0], [0], [1], [0, 0, 1, 1], [], []>} : vector<256x4xf32>, vector<4x128xf32>, vector<256x128xf32> -> vector<256x128xf32>
    %43 = arith.addf %37, %42 : vector<256x128xf32>
    %44 = vector.extract_strided_slice %0 {offsets = [0, 2, 1, 0], sizes = [1, 16, 16, 4], strides = [1, 1, 1, 1]} : vector<1x18x18x4xf32> to vector<1x16x16x4xf32>
    %45 = vector.shape_cast %44 : vector<1x16x16x4xf32> to vector<256x4xf32>
    %c2_36 = arith.constant 2 : index
    %c1_37 = arith.constant 1 : index
    %c0_38 = arith.constant 0 : index
    %c0_39 = arith.constant 0 : index
    %46 = vector.load %arg2[%c2_36, %c1_37, %c0_38, %c0_39] : memref<3x3x4x128xf32, #tpu.memory_space<vmem>>, vector<1x1x4x128xf32>
    %47 = vector.shape_cast %46 : vector<1x1x4x128xf32> to vector<4x128xf32>
    %cst_40 = arith.constant dense<0.000000e+00> : vector<256x128xf32>
    %48 = tpu.matmul %45, %47, %cst_40 {dimension_numbers = #tpu.dot_dimension_numbers<[1], [0], [0], [1], [0, 0, 1, 1], [], []>} : vector<256x4xf32>, vector<4x128xf32>, vector<256x128xf32> -> vector<256x128xf32>
    %49 = arith.addf %43, %48 : vector<256x128xf32>
    %50 = vector.extract_strided_slice %0 {offsets = [0, 2, 2, 0], sizes = [1, 16, 16, 4], strides = [1, 1, 1, 1]} : vector<1x18x18x4xf32> to vector<1x16x16x4xf32>
    %51 = vector.shape_cast %50 : vector<1x16x16x4xf32> to vector<256x4xf32>
    %c2_41 = arith.constant 2 : index
    %c2_42 = arith.constant 2 : index
    %c0_43 = arith.constant 0 : index
    %c0_44 = arith.constant 0 : index
    %52 = vector.load %arg2[%c2_41, %c2_42, %c0_43, %c0_44] : memref<3x3x4x128xf32, #tpu.memory_space<vmem>>, vector<1x1x4x128xf32>
    %53 = vector.shape_cast %52 : vector<1x1x4x128xf32> to vector<4x128xf32>
    %cst_45 = arith.constant dense<0.000000e+00> : vector<256x128xf32>
    %54 = tpu.matmul %51, %53, %cst_45 {dimension_numbers = #tpu.dot_dimension_numbers<[1], [0], [0], [1], [0, 0, 1, 1], [], []>} : vector<256x4xf32>, vector<4x128xf32>, vector<256x128xf32> -> vector<256x128xf32>
    %55 = arith.addf %49, %54 : vector<256x128xf32>
    %56 = vector.shape_cast %55 : vector<256x128xf32> to vector<1x256x128xf32>
    %c0_46 = arith.constant 0 : index
    %c0_47 = arith.constant 0 : index
    %c0_48 = arith.constant 0 : index
    %57 = vector.load %arg3[%c0_46, %c0_47, %c0_48] : memref<1x256x128xf32, #tpu.memory_space<vmem>>, vector<1x256x128xf32>
    tpu.vector_store %arg3[%c0_46, %c0_47, %c0_48], %56 {strides = array<i32>} : memref<1x256x128xf32, #tpu.memory_space<vmem>>, vector<1x256x128xf32>,
    %cst_49 = arith.constant dense<0.000000e+00> : vector<128xf32>
    %58 = vector.multi_reduction <add>, %55, %cst_49 [0] : vector<256x128xf32> to vector<128xf32>
    %59 = vector.shape_cast %58 : vector<128xf32> to vector<1x128xf32>
    %60 = vector.shape_cast %59 : vector<1x128xf32> to vector<1x1x128xf32>
    %c0_50 = arith.constant 0 : index
    %c0_51 = arith.constant 0 : index
    %c0_52 = arith.constant 0 : index
    %61 = vector.load %arg4[%c0_50, %c0_51, %c0_52] : memref<1x1x128xf32, #tpu.memory_space<vmem>>, vector<1x1x128xf32>
    tpu.vector_store %arg4[%c0_50, %c0_51, %c0_52], %60 {strides = array<i32>} : memref<1x1x128xf32, #tpu.memory_space<vmem>>, vector<1x1x128xf32>,
    %62 = arith.mulf %55, %55 : vector<256x128xf32>
    %cst_53 = arith.constant dense<0.000000e+00> : vector<128xf32>
    %63 = vector.multi_reduction <add>, %62, %cst_53 [0] : vector<256x128xf32> to vector<128xf32>
    %64 = vector.shape_cast %63 : vector<128xf32> to vector<1x128xf32>
    %65 = vector.shape_cast %64 : vector<1x128xf32> to vector<1x1x128xf32>
    %c0_54 = arith.constant 0 : index
    %c0_55 = arith.constant 0 : index
    %c0_56 = arith.constant 0 : index
    %66 = vector.load %arg5[%c0_54, %c0_55, %c0_56] : memref<1x1x128xf32, #tpu.memory_space<vmem>>, vector<1x1x128xf32>
    tpu.vector_store %arg5[%c0_54, %c0_55, %c0_56], %65 {strides = array<i32>} : memref<1x1x128xf32, #tpu.memory_space<vmem>>, vector<1x1x128xf32>,
    return
  }
  func.func @transform_0(%arg0: i32) -> (i32, i32, i32, i32) {
    %c0_i32 = arith.constant 0 : i32
    %c0_i32_0 = arith.constant 0 : i32
    %c0_i32_1 = arith.constant 0 : i32
    %c0_i32_2 = arith.constant 0 : i32
    return %arg0, %c0_i32, %c0_i32_0, %c0_i32_1 : i32, i32, i32, i32
  }
  func.func @transform_1(%arg0: i32) -> (i32, i32, i32, i32) {
    %c0_i32 = arith.constant 0 : i32
    %c0_i32_0 = arith.constant 0 : i32
    %c0_i32_1 = arith.constant 0 : i32
    %c0_i32_2 = arith.constant 0 : i32
    %c0_i32_3 = arith.constant 0 : i32
    return %c0_i32, %c0_i32_0, %c0_i32_1, %c0_i32_2 : i32, i32, i32, i32
  }
  func.func @transform_2(%arg0: i32) -> (i32, i32, i32) {
    %c0_i32 = arith.constant 0 : i32
    %c0_i32_0 = arith.constant 0 : i32
    %c0_i32_1 = arith.constant 0 : i32
    return %arg0, %c0_i32, %c0_i32_0 : i32, i32, i32
  }
  func.func @transform_3(%arg0: i32) -> (i32, i32, i32) {
    %c0_i32 = arith.constant 0 : i32
    %c0_i32_0 = arith.constant 0 : i32
    %c0_i32_1 = arith.constant 0 : i32
    return %arg0, %c0_i32, %c0_i32_0 : i32, i32, i32
  }
  func.func @transform_4(%arg0: i32) -> (i32, i32, i32) {
    %c0_i32 = arith.constant 0 : i32
    %c0_i32_0 = arith.constant 0 : i32
    %c0_i32_1 = arith.constant 0 : i32
    return %arg0, %c0_i32, %c0_i32_0 : i32, i32, i32
  }
}

</mosaic_0001>

<llo_original>
// kernel: tpu_custom_call.1
$region0: #{tpu_custom_call.1}
  #allocation0 [shape = 'u32[]', space=smem, size = 0x4, offset = 0x4, fixed_abs, tag = 'smem constant byte address 0x4 - core index']
  #allocation1 [shape = 'u32[72,128]{1,0:T(1,128)}', space=vmem, size = 0x9000, scoped, tag = 'internal scratch']
  %s0 = inlined_call_operand.vmem [shape: f32[2,18,18,4], index: 0, kind: input, shape index: {}]
  %s1 = inlined_call_operand.vmem [shape: f32[3,3,4,128], index: 1, kind: input, shape index: {}]
  %s2 = inlined_call_operand.hbm [shape: f32[2,256,128], index: 2, kind: output, shape index: {0}]
  %s3 = inlined_call_operand.hbm [shape: f32[2,1,128], index: 3, kind: output, shape index: {1}]
  %s4 = inlined_call_operand.hbm [shape: f32[2,1,128], index: 4, kind: output, shape index: {2}]
  %5 = xla_tuple %s2, %s3, %s4
  %s6 = sld [smem:[#allocation0]]
  $region57: #{tpu_custom_call.1} parent=0
    _
  %s8 = ssub.s32 1, %s6
  %s9 = scalar_select 0, %s8, %s6
  $region1: #{tpu_custom_call.1} parent=0
    #allocation2 [shape = 'u8[262144]{0}', space=vmem, size = 0x40000, scoped, tag = 'output window, operand 0']
    #allocation3 [shape = 's32[2]{0}', space=sflag, size = 0x8, scoped, tag = 'scoped memory for tpu_custom_call.1']
    #allocation4 [shape = 'u8[1024]{0}', space=vmem, size = 0x400, scoped, tag = 'output window, operand 1']
    #allocation5 [shape = 's32[2]{0}', space=sflag, size = 0x8, scoped, tag = 'scoped memory for tpu_custom_call.1']
    #allocation6 [shape = 'u8[1024]{0}', space=vmem, size = 0x400, scoped, tag = 'output window, operand 2']
    %10 = vsyncpa [#allocation3], 0
    %s11 = scalar_lea.sflag [#allocation3], 1
    %12 = vsyncpa %s11, 0
    %13 = vsyncpa [#allocation5], 0
    %s14 = scalar_lea.sflag [#allocation5], 1
    %15 = vsyncpa %s14, 0
    loop: start=0, step=1, limit=4
    $region2: #{tpu_custom_call.1} parent=1 // loop_pre_header
      _
    $region3: #{tpu_custom_call.1} parent=1 // loop_header
      %s17 = sphi 0, %s21
      %p18 = scmp.ge.s32.totalorder %s17, 4
      %s27 = sphi 0, %s29
      %s30 = sphi 0, %s27
      %s31 = sphi 0, %s30
      %s47 = sphi 0, %s31
      %s51 = sphi 0, %s51
      %s53 = sphi 0, %s51
      %s54 = sphi 0, %s53
      %s68 = sphi 0, %s54
      %s74 = sphi 0, %s76
      %s77 = sphi 0, %s74
      %s78 = sphi 0, %s77
      %s94 = sphi 0, %s78
      %s100 = sphi 0, %s102
      %s103 = sphi 0, %s100
      %s104 = sphi 0, %s103
      %s120 = sphi 0, %s104
      %s126 = sphi 0, %s128
      %s129 = sphi 0, %s126
      %s130 = sphi 0, %s129
      %s146 = sphi 0, %s130
    $region4: #{tpu_custom_call.1} parent=1 // loop_header_branch
      %20 = sbr.rel (%p18) target = $region8
    $region5: #{tpu_custom_call.1} parent=1 // loop_body
      %s22 = ssub.s32 %s17, 1
      %s23 = ssub.s32 %s17, 2
      %s24 = sadd.s32 %s17, 1
      %s25 = ssub.s32 %s17, %s24
      %p26 = scmp.eq.s32.totalorder %s25, 0
      %s28 = sadd.s32 %s27, 1
      %s29 = scalar_select %p26, %s27, %s28
      %p32 = pneg %p26
      %p33 = scmp.eq.s32.totalorder %s17, 1
      %p34 = por %p32, %p33
      %p35 = scmp.ne.s32.totalorder %s27, %s30
      %p36 = scmp.eq.s32.totalorder %s17, 0
      %p37 = por %p35, %p36
      %p38 = scmp.ne.s32.totalorder %s27, %s30
      %p39 = scmp.eq.s32.totalorder %s22, 1
      %p40 = por %p38, %p39
      %p41 = scmp.ne.s32.totalorder %s30, %s31
      %p42 = scmp.eq.s32.totalorder %s22, 0
      %p43 = por %p41, %p42
      %p44 = scmp.ne.s32.totalorder %s30, %s31
      %p45 = scmp.eq.s32.totalorder %s23, 1
      %p46 = por %p44, %p45
      %p48 = scmp.ne.s32.totalorder %s31, %s47
      %p49 = scmp.eq.s32.totalorder %s23, 0
      %p50 = por %p48, %p49
      %s52 = sadd.s32 %s51, 1
      %p55 = scmp.eq.s32.totalorder %s17, 1
      %p56 = scmp.ne.s32.totalorder %s51, %s53
      %p57 = scmp.eq.s32.totalorder %s17, 0
      %p58 = por %p56, %p57
      %p59 = scmp.ne.s32.totalorder %s51, %s53
      %p60 = scmp.eq.s32.totalorder %s22, 1
      %p61 = por %p59, %p60
      %p62 = scmp.ne.s32.totalorder %s53, %s54
      %p63 = scmp.eq.s32.totalorder %s22, 0
      %p64 = por %p62, %p63
      %p65 = scmp.ne.s32.totalorder %s53, %s54
      %p66 = scmp.eq.s32.totalorder %s23, 1
      %p67 = por %p65, %p66
      %p69 = scmp.ne.s32.totalorder %s54, %s68
      %p70 = scmp.eq.s32.totalorder %s23, 0
      %p71 = por %p69, %p70
      %s72 = ssub.s32 %s17, %s24
      %p73 = scmp.eq.s32.totalorder %s72, 0
      %s75 = sadd.s32 %s74, 1
      %s76 = scalar_select %p73, %s74, %s75
      %p79 = pneg %p73
      %p80 = scmp.eq.s32.totalorder %s17, 1
      %p81 = por %p79, %p80
      %p82 = scmp.ne.s32.totalorder %s74, %s77
      %p83 = scmp.eq.s32.totalorder %s17, 0
      %p84 = por %p82, %p83
      %p85 = scmp.ne.s32.totalorder %s74, %s77
      %p86 = scmp.eq.s32.totalorder %s22, 1
      %p87 = por %p85, %p86
      %p88 = scmp.ne.s32.totalorder %s77, %s78
      %p89 = scmp.eq.s32.totalorder %s22, 0
      %p90 = por %p88, %p89
      %p91 = scmp.ne.s32.totalorder %s77, %s78
      %p92 = scmp.eq.s32.totalorder %s23, 1
      %p93 = por %p91, %p92
      %p95 = scmp.ne.s32.totalorder %s78, %s94
      %p96 = scmp.eq.s32.totalorder %s23, 0
      %p97 = por %p95, %p96
      %s98 = ssub.s32 %s17, %s24
      %p99 = scmp.eq.s32.totalorder %s98, 0
      %s101 = sadd.s32 %s100, 1
      %s102 = scalar_select %p99, %s100, %s101
      %p105 = pneg %p99
      %p106 = scmp.eq.s32.totalorder %s17, 1
      %p107 = por %p105, %p106
      %p108 = scmp.ne.s32.totalorder %s100, %s103
      %p109 = scmp.eq.s32.totalorder %s17, 0
      %p110 = por %p108, %p109
      %p111 = scmp.ne.s32.totalorder %s100, %s103
      %p112 = scmp.eq.s32.totalorder %s22, 1
      %p113 = por %p111, %p112
      %p114 = scmp.ne.s32.totalorder %s103, %s104
      %p115 = scmp.eq.s32.totalorder %s22, 0
      %p116 = por %p114, %p115
      %p117 = scmp.ne.s32.totalorder %s103, %s104
      %p118 = scmp.eq.s32.totalorder %s23, 1
      %p119 = por %p117, %p118
      %p121 = scmp.ne.s32.totalorder %s104, %s120
      %p122 = scmp.eq.s32.totalorder %s23, 0
      %p123 = por %p121, %p122
      %s124 = ssub.s32 %s17, %s24
      %p125 = scmp.eq.s32.totalorder %s124, 0
      %s127 = sadd.s32 %s126, 1
      %s128 = scalar_select %p125, %s126, %s127
      %p131 = pneg %p125
      %p132 = scmp.eq.s32.totalorder %s17, 1
      %p133 = por %p131, %p132
      %p134 = scmp.ne.s32.totalorder %s126, %s129
      %p135 = scmp.eq.s32.totalorder %s17, 0
      %p136 = por %p134, %p135
      %p137 = scmp.ne.s32.totalorder %s126, %s129
      %p138 = scmp.eq.s32.totalorder %s22, 1
      %p139 = por %p137, %p138
      %p140 = scmp.ne.s32.totalorder %s129, %s130
      %p141 = scmp.eq.s32.totalorder %s22, 0
      %p142 = por %p140, %p141
      %p143 = scmp.ne.s32.totalorder %s129, %s130
      %p144 = scmp.eq.s32.totalorder %s23, 1
      %p145 = por %p143, %p144
      %p147 = scmp.ne.s32.totalorder %s130, %s146
      %p148 = scmp.eq.s32.totalorder %s23, 0
      %p149 = por %p147, %p148
      %p150 = scmp.le.s32.totalorder 1, %s17
      %p151 = scmp.lt.s32.totalorder %s17, 3
      %p152 = pnand %p150, %p151
      %p153 = pneg %p152
      // Predicated region
      $region9: #{tpu_custom_call.1} parent=5 // pred_check
        _
      $region10: #{tpu_custom_call.1} parent=5 // pred_check_branch
        %155 = sbr.rel (%p152) target = $region12
      $region11: #{tpu_custom_call.1} parent=5 // pred_region
        %s156 = ssub.s32 %s17, 1
        // Predicated region
        $region13: #{tpu_custom_call.1} parent=11 // pred_check
          %p157 = pneg %p64
        $region14: #{tpu_custom_call.1} parent=11 // pred_check_branch
          %159 = sbr.rel (%p157) target = $region16
        $region15: #{tpu_custom_call.1} parent=11 // pred_region
          _
        $region16: #{tpu_custom_call.1} parent=11 // pred_fallthru
          _
      $region12: #{tpu_custom_call.1} parent=5 // pred_fallthru
        _
      %p160 = scmp.lt.s32.totalorder %s17, 2
      // Predicated region
      $region17: #{tpu_custom_call.1} parent=5 // pred_check
        %p161 = pneg %p160
      $region18: #{tpu_custom_call.1} parent=5 // pred_check_branch
        %163 = sbr.rel (%p161) target = $region20
      $region19: #{tpu_custom_call.1} parent=5 // pred_region
        // Predicated region
        $region21: #{tpu_custom_call.1} parent=19 // pred_check
          %p164 = pneg %p37
        $region22: #{tpu_custom_call.1} parent=19 // pred_check_branch
          %166 = sbr.rel (%p164) target = $region24
        $region23: #{tpu_custom_call.1} parent=19 // pred_region
          %p167 = scmp.lt.s32.totalorder %s17, 1
          %s168 = scalar_select %p167, %s17, 1
          %s169 = smul.addr %s168, 54
          %s170 = smul.addr %s169, 8
          %s171 = scalar_lea.vmem %s0, %s170
        $region24: #{tpu_custom_call.1} parent=19 // pred_fallthru
          _
      $region20: #{tpu_custom_call.1} parent=5 // pred_fallthru
        _
      %p172 = scmp.le.s32.totalorder 1, %s17
      %p173 = scmp.lt.s32.totalorder %s17, 3
      %p174 = pnand %p172, %p173
      %p175 = pneg %p174
      // Predicated region
      $region25: #{tpu_custom_call.1} parent=5 // pred_check
        _
      $region26: #{tpu_custom_call.1} parent=5 // pred_check_branch
        %177 = sbr.rel (%p174) target = $region28
      $region27: #{tpu_custom_call.1} parent=5 // pred_region
        %s178 = ssub.s32 %s17, 1
        %p179 = scmp.lt.s32.totalorder %s22, 1
        %s180 = scalar_select %p179, %s22, 1
        %s181 = smul.addr %s180, 54
        %s182 = smul.addr %s181, 8
        %s183 = scalar_lea.vmem %s0, %s182
        %p184 = pneg %p43
        %p185 = pneg %p40
        %p186 = pneg %p64
        %p187 = pneg %p61
        %p188 = pneg %p90
        %p189 = pneg %p87
        %s190 = sand.u32 %s77, 1
        %s191 = scalar_lea.sflag [#allocation3], %s190
        %s192 = sand.u32 %s77, 1
        %s193 = smul.addr %s192, 256
        %s194 = scalar_lea.vmem [#allocation2], %s193
        %p195 = pneg %p116
        %p196 = pneg %p113
        %s197 = sand.u32 %s22, 1
        %s198 = scalar_lea.sflag [#allocation5], %s197
        %s199 = sand.u32 %s103, 1
        %s200 = scalar_lea.vmem [#allocation4], %s199
        %p201 = pneg %p142
        %p202 = pneg %p139
        %s203 = sand.u32 %s22, 1
        %s204 = scalar_lea.sflag [#allocation5], %s203
        %s205 = sand.u32 %s129, 1
        %s206 = scalar_lea.vmem [#allocation6], %s205
        %p207 = scmp.lt.s32.totalorder %s22, 1
        %s208 = scalar_select %p207, %s22, 1
        %s209 = smul.addr %s208, 54
        %s210 = smul.addr %s209, 8
        %s211 = scalar_lea.vmem %s0, %s210
        %v212 = vld [vmem:[%s211] sm:$0xff]
        %v213 = vld [vmem:[%s211 + $0x8] sm:$0xff]
        %v214 = vld [vmem:[%s211 + $0x10] sm:$0x3]
        %v215 = vld [vmem:[%s211 + $0x18] sm:$0xff]
        %v216 = vld [vmem:[%s211 + $0x20] sm:$0xff]
        %v217 = vld [vmem:[%s211 + $0x28] sm:$0x3]
        %v218 = vld [vmem:[%s211 + $0x30] sm:$0xff]
        %v219 = vld [vmem:[%s211 + $0x38] sm:$0xff]
        %v220 = vld [vmem:[%s211 + $0x40] sm:$0x3]
        %v221 = vld [vmem:[%s211 + $0x48] sm:$0xff]
        %v222 = vld [vmem:[%s211 + $0x50] sm:$0xff]
        %v223 = vld [vmem:[%s211 + $0x58] sm:$0x3]
        %v224 = vld [vmem:[%s211 + $0x60] sm:$0xff]
        %v225 = vld [vmem:[%s211 + $0x68] sm:$0xff]
        %v226 = vld [vmem:[%s211 + $0x70] sm:$0x3]
        %v227 = vld [vmem:[%s211 + $0x78] sm:$0xff]
        %v228 = vld [vmem:[%s211 + $0x80] sm:$0xff]
        %v229 = vld [vmem:[%s211 + $0x88] sm:$0x3]
        %v230 = vld [vmem:[%s211 + $0x90] sm:$0xff]
        %v231 = vld [vmem:[%s211 + $0x98] sm:$0xff]
        %v232 = vld [vmem:[%s211 + $0xa0] sm:$0x3]
        %v233 = vld [vmem:[%s211 + $0xa8] sm:$0xff]
        %v234 = vld [vmem:[%s211 + $0xb0] sm:$0xff]
        %v235 = vld [vmem:[%s211 + $0xb8] sm:$0x3]
        %v236 = vld [vmem:[%s211 + $0xc0] sm:$0xff]
        %v237 = vld [vmem:[%s211 + $0xc8] sm:$0xff]
        %v238 = vld [vmem:[%s211 + $0xd0] sm:$0x3]
        %v239 = vld [vmem:[%s211 + $0xd8] sm:$0xff]
        %v240 = vld [vmem:[%s211 + $0xe0] sm:$0xff]
        %v241 = vld [vmem:[%s211 + $0xe8] sm:$0x3]
        %v242 = vld [vmem:[%s211 + $0xf0] sm:$0xff]
        %v243 = vld [vmem:[%s211 + $0xf8] sm:$0xff]
        %v244 = vld [vmem:[%s211 + $0x100] sm:$0x3]
        %v245 = vld [vmem:[%s211 + $0x108] sm:$0xff]
        %v246 = vld [vmem:[%s211 + $0x110] sm:$0xff]
        %v247 = vld [vmem:[%s211 + $0x118] sm:$0x3]
        %v248 = vld [vmem:[%s211 + $0x120] sm:$0xff]
        %v249 = vld [vmem:[%s211 + $0x128] sm:$0xff]
        %v250 = vld [vmem:[%s211 + $0x130] sm:$0x3]
        %v251 = vld [vmem:[%s211 + $0x138] sm:$0xff]
        %v252 = vld [vmem:[%s211 + $0x140] sm:$0xff]
        %v253 = vld [vmem:[%s211 + $0x148] sm:$0x3]
        %v254 = vld [vmem:[%s211 + $0x150] sm:$0xff]
        %v255 = vld [vmem:[%s211 + $0x158] sm:$0xff]
        %v256 = vld [vmem:[%s211 + $0x160] sm:$0x3]
        %v257 = vld [vmem:[%s211 + $0x168] sm:$0xff]
        %v258 = vld [vmem:[%s211 + $0x170] sm:$0xff]
        %v259 = vld [vmem:[%s211 + $0x178] sm:$0x3]
        %v260 = vld [vmem:[%s211 + $0x180] sm:$0xff]
        %v261 = vld [vmem:[%s211 + $0x188] sm:$0xff]
        %v262 = vld [vmem:[%s211 + $0x190] sm:$0x3]
        %v263 = vld [vmem:[%s211 + $0x198] sm:$0xff]
        %v264 = vld [vmem:[%s211 + $0x1a0] sm:$0xff]
        %v265 = vld [vmem:[%s211 + $0x1a8] sm:$0x3]
        %v266 = vld [vmem:[%s1] sm:$0xf]
        %vm315 = vcmask 1046528
        %v316 = vrot.slane %v212, 1
        %v317 = vrot.slane %v213, 1
        %v318 = vsel %vm315, %v316, %v317
        %v319 = vrot.slane %v214, 1
        %v320 = vsel %vm315, %v317, %v319
        %v321 = vrot.slane %v215, 1
        %v322 = vrot.slane %v216, 1
        %v323 = vsel %vm315, %v321, %v322
        %v324 = vrot.slane %v217, 1
        %v325 = vsel %vm315, %v322, %v324
        %v326 = vrot.slane %v218, 1
        %v327 = vrot.slane %v219, 1
        %v328 = vsel %vm315, %v326, %v327
        %v329 = vrot.slane %v220, 1
        %v330 = vsel %vm315, %v327, %v329
        %v331 = vrot.slane %v221, 1
        %v332 = vrot.slane %v222, 1
        %v333 = vsel %vm315, %v331, %v332
        %v334 = vrot.slane %v223, 1
        %v335 = vsel %vm315, %v332, %v334
        %v336 = vrot.slane %v224, 1
        %v337 = vrot.slane %v225, 1
        %v338 = vsel %vm315, %v336, %v337
        %v339 = vrot.slane %v226, 1
        %v340 = vsel %vm315, %v337, %v339
        %v341 = vrot.slane %v227, 1
        %v342 = vrot.slane %v228, 1
        %v343 = vsel %vm315, %v341, %v342
        %v344 = vrot.slane %v229, 1
        %v345 = vsel %vm315, %v342, %v344
        %v346 = vrot.slane %v230, 1
        %v347 = vrot.slane %v231, 1
        %v348 = vsel %vm315, %v346, %v347
        %v349 = vrot.slane %v232, 1
        %v350 = vsel %vm315, %v347, %v349
        %v351 = vrot.slane %v233, 1
        %v352 = vrot.slane %v234, 1
        %v353 = vsel %vm315, %v351, %v352
        %v354 = vrot.slane %v235, 1
        %v355 = vsel %vm315, %v352, %v354
        %v356 = vrot.slane %v236, 1
        %v357 = vrot.slane %v237, 1
        %v358 = vsel %vm315, %v356, %v357
        %v359 = vrot.slane %v238, 1
        %v360 = vsel %vm315, %v357, %v359
        %v361 = vrot.slane %v239, 1
        %v362 = vrot.slane %v240, 1
        %v363 = vsel %vm315, %v361, %v362
        %v364 = vrot.slane %v241, 1
        %v365 = vsel %vm315, %v362, %v364
        %v366 = vrot.slane %v242, 1
        %v367 = vrot.slane %v243, 1
        %v368 = vsel %vm315, %v366, %v367
        %v369 = vrot.slane %v244, 1
        %v370 = vsel %vm315, %v367, %v369
        %v371 = vrot.slane %v245, 1
        %v372 = vrot.slane %v246, 1
        %v373 = vsel %vm315, %v371, %v372
        %v374 = vrot.slane %v247, 1
        %v375 = vsel %vm315, %v372, %v374
        %v376 = vrot.slane %v248, 1
        %v377 = vrot.slane %v249, 1
        %v378 = vsel %vm315, %v376, %v377
        %v379 = vrot.slane %v250, 1
        %v380 = vsel %vm315, %v377, %v379
        %v381 = vrot.slane %v251, 1
        %v382 = vrot.slane %v252, 1
        %v383 = vsel %vm315, %v381, %v382
        %v384 = vrot.slane %v253, 1
        %v385 = vsel %vm315, %v382, %v384
        %v386 = vrot.slane %v254, 1
        %v387 = vrot.slane %v255, 1
        %v388 = vsel %vm315, %v386, %v387
        %v389 = vrot.slane %v256, 1
        %v390 = vsel %vm315, %v387, %v389
        %v391 = vrot.slane %v257, 1
        %v392 = vrot.slane %v258, 1
        %v393 = vsel %vm315, %v391, %v392
        %v394 = vrot.slane %v259, 1
        %v395 = vsel %vm315, %v392, %v394
        %s396 = scalar_lea.vmem %s1, 4
        %v397 = vld [vmem:[%s396] sm:$0xf]
        %vm398 = vcmask 31744
        %v399 = vsel %vm398, %v318, 0
        %v401 = vsel %vm398, %v320, 0
        %v403 = vsel %vm398, %v323, 0
        %v405 = vsel %vm398, %v325, 0
        %v407 = vsel %vm398, %v328, 0
        %v409 = vsel %vm398, %v330, 0
        %v411 = vsel %vm398, %v333, 0
        %v413 = vsel %vm398, %v335, 0
        %v415 = vsel %vm398, %v338, 0
        %v417 = vsel %vm398, %v340, 0
        %v419 = vsel %vm398, %v343, 0
        %v421 = vsel %vm398, %v345, 0
        %v423 = vsel %vm398, %v348, 0
        %v425 = vsel %vm398, %v350, 0
        %v427 = vsel %vm398, %v353, 0
        %v429 = vsel %vm398, %v355, 0
        %v431 = vsel %vm398, %v358, 0
        %v433 = vsel %vm398, %v360, 0
        %v435 = vsel %vm398, %v363, 0
        %v437 = vsel %vm398, %v365, 0
        %v439 = vsel %vm398, %v368, 0
        %v441 = vsel %vm398, %v370, 0
        %v443 = vsel %vm398, %v373, 0
        %v445 = vsel %vm398, %v375, 0
        %v447 = vsel %vm398, %v378, 0
        %v449 = vsel %vm398, %v380, 0
        %v451 = vsel %vm398, %v383, 0
        %v453 = vsel %vm398, %v385, 0
        %v455 = vsel %vm398, %v388, 0
        %v457 = vsel %vm398, %v390, 0
        %v459 = vsel %vm398, %v393, 0
        %v461 = vsel %vm398, %v395, 0
        %vm463 = vcmask 1043456
        %v465 = vsel %vm463, %v397, 0
        %467 = vmatpush.msra.mxu0 0.0
        %468 = vmatpush.msra.mxu0 0.0
        %469 = vmatpush.msra.mxu0 0.0
        %470 = vmatpush.msra.mxu0 0.0
        %471 = vmatpush.msra.mxu0 0.0
        %472 = vmatpush.msra.mxu0 0.0
        %473 = vmatpush.msra.mxu0 0.0
        %474 = vmatpush.msra.mxu0 0.0
        %475 = vmatpush.msra.mxu0 0.0
        %476 = vmatpush.msra.mxu0 0.0
        %477 = vmatpush.msra.mxu0 0.0
        %478 = vmatpush.msra.mxu0 0.0
        %479 = vmatpush.msra.mxu0 0.0
        %480 = vmatpush.msra.mxu0 0.0
        %481 = vmatpush.msra.mxu0 0.0
        %482 = vmatpush.msra.mxu0 %v465
        %483 = vmatmul.f32.gmra.mxu0 %v399
        %v484 = vpop.f32.mrf.mxu0
        %v485 = vadd.f32 0.0, %v484
        %486 = vmatmul.f32.gmra.mxu0 %v401
        %v487 = vpop.f32.mrf.mxu0
        %v488 = vadd.f32 0.0, %v487
        %489 = vmatmul.f32.gmra.mxu0 %v403
        %v490 = vpop.f32.mrf.mxu0
        %v491 = vadd.f32 0.0, %v490
        %492 = vmatmul.f32.gmra.mxu0 %v405
        %v493 = vpop.f32.mrf.mxu0
        %v494 = vadd.f32 0.0, %v493
        %495 = vmatmul.f32.gmra.mxu0 %v407
        %v496 = vpop.f32.mrf.mxu0
        %v497 = vadd.f32 0.0, %v496
        %498 = vmatmul.f32.gmra.mxu0 %v409
        %v499 = vpop.f32.mrf.mxu0
        %v500 = vadd.f32 0.0, %v499
        %501 = vmatmul.f32.gmra.mxu0 %v411
        %v502 = vpop.f32.mrf.mxu0
        %v503 = vadd.f32 0.0, %v502
        %504 = vmatmul.f32.gmra.mxu0 %v413
        %v505 = vpop.f32.mrf.mxu0
        %v506 = vadd.f32 0.0, %v505
        %507 = vmatmul.f32.gmra.mxu0 %v415
        %v508 = vpop.f32.mrf.mxu0
        %v509 = vadd.f32 0.0, %v508
        %510 = vmatmul.f32.gmra.mxu0 %v417
        %v511 = vpop.f32.mrf.mxu0
        %v512 = vadd.f32 0.0, %v511
        %513 = vmatmul.f32.gmra.mxu0 %v419
        %v514 = vpop.f32.mrf.mxu0
        %v515 = vadd.f32 0.0, %v514
        %516 = vmatmul.f32.gmra.mxu0 %v421
        %v517 = vpop.f32.mrf.mxu0
        %v518 = vadd.f32 0.0, %v517
        %519 = vmatmul.f32.gmra.mxu0 %v423
        %v520 = vpop.f32.mrf.mxu0
        %v521 = vadd.f32 0.0, %v520
        %522 = vmatmul.f32.gmra.mxu0 %v425
        %v523 = vpop.f32.mrf.mxu0
        %v524 = vadd.f32 0.0, %v523
        %525 = vmatmul.f32.gmra.mxu0 %v427
        %v526 = vpop.f32.mrf.mxu0
        %v527 = vadd.f32 0.0, %v526
        %528 = vmatmul.f32.gmra.mxu0 %v429
        %v529 = vpop.f32.mrf.mxu0
        %v530 = vadd.f32 0.0, %v529
        %531 = vmatmul.f32.gmra.mxu0 %v431
        %v532 = vpop.f32.mrf.mxu0
        %v533 = vadd.f32 0.0, %v532
        %534 = vmatmul.f32.gmra.mxu0 %v433
        %v535 = vpop.f32.mrf.mxu0
        %v536 = vadd.f32 0.0, %v535
        %537 = vmatmul.f32.gmra.mxu0 %v435
        %v538 = vpop.f32.mrf.mxu0
        %v539 = vadd.f32 0.0, %v538
        %540 = vmatmul.f32.gmra.mxu0 %v437
        %v541 = vpop.f32.mrf.mxu0
        %v542 = vadd.f32 0.0, %v541
        %543 = vmatmul.f32.gmra.mxu0 %v439
        %v544 = vpop.f32.mrf.mxu0
        %v545 = vadd.f32 0.0, %v544
        %546 = vmatmul.f32.gmra.mxu0 %v441
        %v547 = vpop.f32.mrf.mxu0
        %v548 = vadd.f32 0.0, %v547
        %549 = vmatmul.f32.gmra.mxu0 %v443
        %v550 = vpop.f32.mrf.mxu0
        %v551 = vadd.f32 0.0, %v550
        %552 = vmatmul.f32.gmra.mxu0 %v445
        %v553 = vpop.f32.mrf.mxu0
        %v554 = vadd.f32 0.0, %v553
        %555 = vmatmul.f32.gmra.mxu0 %v447
        %v556 = vpop.f32.mrf.mxu0
        %v557 = vadd.f32 0.0, %v556
        %558 = vmatmul.f32.gmra.mxu0 %v449
        %v559 = vpop.f32.mrf.mxu0
        %v560 = vadd.f32 0.0, %v559
        %561 = vmatmul.f32.gmra.mxu0 %v451
        %v562 = vpop.f32.mrf.mxu0
        %v563 = vadd.f32 0.0, %v562
        %564 = vmatmul.f32.gmra.mxu0 %v453
        %v565 = vpop.f32.mrf.mxu0
        %v566 = vadd.f32 0.0, %v565
        %567 = vmatmul.f32.gmra.mxu0 %v455
        %v568 = vpop.f32.mrf.mxu0
        %v569 = vadd.f32 0.0, %v568
        %570 = vmatmul.f32.gmra.mxu0 %v457
        %v571 = vpop.f32.mrf.mxu0
        %v572 = vadd.f32 0.0, %v571
        %573 = vmatmul.f32.gmra.mxu0 %v459
        %v574 = vpop.f32.mrf.mxu0
        %v575 = vadd.f32 0.0, %v574
        %576 = vmatmul.f32.gmra.mxu0 %v461
        %v577 = vpop.f32.mrf.mxu0
        %v578 = vadd.f32 0.0, %v577
        %579 = vdwg.mxu0
        %v580 = vsel %vm398, %v212, 0
        %v582 = vsel %vm398, %v213, 0
        %v584 = vsel %vm398, %v215, 0
        %v586 = vsel %vm398, %v216, 0
        %v588 = vsel %vm398, %v218, 0
        %v590 = vsel %vm398, %v219, 0
        %v592 = vsel %vm398, %v221, 0
        %v594 = vsel %vm398, %v222, 0
        %v596 = vsel %vm398, %v224, 0
        %v598 = vsel %vm398, %v225, 0
        %v600 = vsel %vm398, %v227, 0
        %v602 = vsel %vm398, %v228, 0
        %v604 = vsel %vm398, %v230, 0
        %v606 = vsel %vm398, %v231, 0
        %v608 = vsel %vm398, %v233, 0
        %v610 = vsel %vm398, %v234, 0
        %v612 = vsel %vm398, %v236, 0
        %v614 = vsel %vm398, %v237, 0
        %v616 = vsel %vm398, %v239, 0
        %v618 = vsel %vm398, %v240, 0
        %v620 = vsel %vm398, %v242, 0
        %v622 = vsel %vm398, %v243, 0
        %v624 = vsel %vm398, %v245, 0
        %v626 = vsel %vm398, %v246, 0
        %v628 = vsel %vm398, %v248, 0
        %v630 = vsel %vm398, %v249, 0
        %v632 = vsel %vm398, %v251, 0
        %v634 = vsel %vm398, %v252, 0
        %v636 = vsel %vm398, %v254, 0
        %v638 = vsel %vm398, %v255, 0
        %v640 = vsel %vm398, %v257, 0
        %v642 = vsel %vm398, %v258, 0
        %v645 = vsel %vm463, %v266, 0
        %647 = vmatpush.msra.mxu0 0.0
        %648 = vmatpush.msra.mxu0 0.0
        %649 = vmatpush.msra.mxu0 0.0
        %650 = vmatpush.msra.mxu0 0.0
        %651 = vmatpush.msra.mxu0 0.0
        %652 = vmatpush.msra.mxu0 0.0
        %653 = vmatpush.msra.mxu0 0.0
        %654 = vmatpush.msra.mxu0 0.0
        %655 = vmatpush.msra.mxu0 0.0
        %656 = vmatpush.msra.mxu0 0.0
        %657 = vmatpush.msra.mxu0 0.0
        %658 = vmatpush.msra.mxu0 0.0
        %659 = vmatpush.msra.mxu0 0.0
        %660 = vmatpush.msra.mxu0 0.0
        %661 = vmatpush.msra.mxu0 0.0
        %662 = vmatpush.msra.mxu0 %v645
        %663 = vmatmul.f32.gmra.mxu0 %v580
        %v664 = vpop.f32.mrf.mxu0
        %v665 = vadd.f32 %v485, %v664
        %666 = vmatmul.f32.gmra.mxu0 %v582
        %v667 = vpop.f32.mrf.mxu0
        %v668 = vadd.f32 %v488, %v667
        %669 = vmatmul.f32.gmra.mxu0 %v584
        %v670 = vpop.f32.mrf.mxu0
        %v671 = vadd.f32 %v491, %v670
        %672 = vmatmul.f32.gmra.mxu0 %v586
        %v673 = vpop.f32.mrf.mxu0
        %v674 = vadd.f32 %v494, %v673
        %675 = vmatmul.f32.gmra.mxu0 %v588
        %v676 = vpop.f32.mrf.mxu0
        %v677 = vadd.f32 %v497, %v676
        %678 = vmatmul.f32.gmra.mxu0 %v590
        %v679 = vpop.f32.mrf.mxu0
        %v680 = vadd.f32 %v500, %v679
        %681 = vmatmul.f32.gmra.mxu0 %v592
        %v682 = vpop.f32.mrf.mxu0
        %v683 = vadd.f32 %v503, %v682
        %684 = vmatmul.f32.gmra.mxu0 %v594
        %v685 = vpop.f32.mrf.mxu0
        %v686 = vadd.f32 %v506, %v685
        %687 = vmatmul.f32.gmra.mxu0 %v596
        %v688 = vpop.f32.mrf.mxu0
        %v689 = vadd.f32 %v509, %v688
        %690 = vmatmul.f32.gmra.mxu0 %v598
        %v691 = vpop.f32.mrf.mxu0
        %v692 = vadd.f32 %v512, %v691
        %693 = vmatmul.f32.gmra.mxu0 %v600
        %v694 = vpop.f32.mrf.mxu0
        %v695 = vadd.f32 %v515, %v694
        %696 = vmatmul.f32.gmra.mxu0 %v602
        %v697 = vpop.f32.mrf.mxu0
        %v698 = vadd.f32 %v518, %v697
        %699 = vmatmul.f32.gmra.mxu0 %v604
        %v700 = vpop.f32.mrf.mxu0
        %v701 = vadd.f32 %v521, %v700
        %702 = vmatmul.f32.gmra.mxu0 %v606
        %v703 = vpop.f32.mrf.mxu0
        %v704 = vadd.f32 %v524, %v703
        %705 = vmatmul.f32.gmra.mxu0 %v608
        %v706 = vpop.f32.mrf.mxu0
        %v707 = vadd.f32 %v527, %v706
        %708 = vmatmul.f32.gmra.mxu0 %v610
        %v709 = vpop.f32.mrf.mxu0
        %v710 = vadd.f32 %v530, %v709
        %711 = vmatmul.f32.gmra.mxu0 %v612
        %v712 = vpop.f32.mrf.mxu0
        %v713 = vadd.f32 %v533, %v712
        %714 = vmatmul.f32.gmra.mxu0 %v614
        %v715 = vpop.f32.mrf.mxu0
        %v716 = vadd.f32 %v536, %v715
        %717 = vmatmul.f32.gmra.mxu0 %v616
        %v718 = vpop.f32.mrf.mxu0
        %v719 = vadd.f32 %v539, %v718
        %720 = vmatmul.f32.gmra.mxu0 %v618
        %v721 = vpop.f32.mrf.mxu0
        %v722 = vadd.f32 %v542, %v721
        %723 = vmatmul.f32.gmra.mxu0 %v620
        %v724 = vpop.f32.mrf.mxu0
        %v725 = vadd.f32 %v545, %v724
        %726 = vmatmul.f32.gmra.mxu0 %v622
        %v727 = vpop.f32.mrf.mxu0
        %v728 = vadd.f32 %v548, %v727
        %729 = vmatmul.f32.gmra.mxu0 %v624
        %v730 = vpop.f32.mrf.mxu0
        %v731 = vadd.f32 %v551, %v730
        %732 = vmatmul.f32.gmra.mxu0 %v626
        %v733 = vpop.f32.mrf.mxu0
        %v734 = vadd.f32 %v554, %v733
        %735 = vmatmul.f32.gmra.mxu0 %v628
        %v736 = vpop.f32.mrf.mxu0
        %v737 = vadd.f32 %v557, %v736
        %738 = vmatmul.f32.gmra.mxu0 %v630
        %v739 = vpop.f32.mrf.mxu0
        %v740 = vadd.f32 %v560, %v739
        %741 = vmatmul.f32.gmra.mxu0 %v632
        %v742 = vpop.f32.mrf.mxu0
        %v743 = vadd.f32 %v563, %v742
        %744 = vmatmul.f32.gmra.mxu0 %v634
        %v745 = vpop.f32.mrf.mxu0
        %v746 = vadd.f32 %v566, %v745
        %747 = vmatmul.f32.gmra.mxu0 %v636
        %v748 = vpop.f32.mrf.mxu0
        %v749 = vadd.f32 %v569, %v748
        %750 = vmatmul.f32.gmra.mxu0 %v638
        %v751 = vpop.f32.mrf.mxu0
        %v752 = vadd.f32 %v572, %v751
        %753 = vmatmul.f32.gmra.mxu0 %v640
        %v754 = vpop.f32.mrf.mxu0
        %v755 = vadd.f32 %v575, %v754
        %756 = vmatmul.f32.gmra.mxu0 %v642
        %v757 = vpop.f32.mrf.mxu0
        %v758 = vadd.f32 %v578, %v757
        %759 = vdwg.mxu0
        %vm760 = vcmask 1045504
        %v761 = vrot.slane %v212, 2
        %v762 = vrot.slane %v213, 2
        %v763 = vsel %vm760, %v761, %v762
        %v764 = vrot.slane %v214, 2
        %v765 = vsel %vm760, %v762, %v764
        %v766 = vrot.slane %v215, 2
        %v767 = vrot.slane %v216, 2
        %v768 = vsel %vm760, %v766, %v767
        %v769 = vrot.slane %v217, 2
        %v770 = vsel %vm760, %v767, %v769
        %v771 = vrot.slane %v218, 2
        %v772 = vrot.slane %v219, 2
        %v773 = vsel %vm760, %v771, %v772
        %v774 = vrot.slane %v220, 2
        %v775 = vsel %vm760, %v772, %v774
        %v776 = vrot.slane %v221, 2
        %v777 = vrot.slane %v222, 2
        %v778 = vsel %vm760, %v776, %v777
        %v779 = vrot.slane %v223, 2
        %v780 = vsel %vm760, %v777, %v779
        %v781 = vrot.slane %v224, 2
        %v782 = vrot.slane %v225, 2
        %v783 = vsel %vm760, %v781, %v782
        %v784 = vrot.slane %v226, 2
        %v785 = vsel %vm760, %v782, %v784
        %v786 = vrot.slane %v227, 2
        %v787 = vrot.slane %v228, 2
        %v788 = vsel %vm760, %v786, %v787
        %v789 = vrot.slane %v229, 2
        %v790 = vsel %vm760, %v787, %v789
        %v791 = vrot.slane %v230, 2
        %v792 = vrot.slane %v231, 2
        %v793 = vsel %vm760, %v791, %v792
        %v794 = vrot.slane %v232, 2
        %v795 = vsel %vm760, %v792, %v794
        %v796 = vrot.slane %v233, 2
        %v797 = vrot.slane %v234, 2
        %v798 = vsel %vm760, %v796, %v797
        %v799 = vrot.slane %v235, 2
        %v800 = vsel %vm760, %v797, %v799
        %v801 = vrot.slane %v236, 2
        %v802 = vrot.slane %v237, 2
        %v803 = vsel %vm760, %v801, %v802
        %v804 = vrot.slane %v238, 2
        %v805 = vsel %vm760, %v802, %v804
        %v806 = vrot.slane %v239, 2
        %v807 = vrot.slane %v240, 2
        %v808 = vsel %vm760, %v806, %v807
        %v809 = vrot.slane %v241, 2
        %v810 = vsel %vm760, %v807, %v809
        %v811 = vrot.slane %v242, 2
        %v812 = vrot.slane %v243, 2
        %v813 = vsel %vm760, %v811, %v812
        %v814 = vrot.slane %v244, 2
        %v815 = vsel %vm760, %v812, %v814
        %v816 = vrot.slane %v245, 2
        %v817 = vrot.slane %v246, 2
        %v818 = vsel %vm760, %v816, %v817
        %v819 = vrot.slane %v247, 2
        %v820 = vsel %vm760, %v817, %v819
        %v821 = vrot.slane %v248, 2
        %v822 = vrot.slane %v249, 2
        %v823 = vsel %vm760, %v821, %v822
        %v824 = vrot.slane %v250, 2
        %v825 = vsel %vm760, %v822, %v824
        %v826 = vrot.slane %v251, 2
        %v827 = vrot.slane %v252, 2
        %v828 = vsel %vm760, %v826, %v827
        %v829 = vrot.slane %v253, 2
        %v830 = vsel %vm760, %v827, %v829
        %v831 = vrot.slane %v254, 2
        %v832 = vrot.slane %v255, 2
        %v833 = vsel %vm760, %v831, %v832
        %v834 = vrot.slane %v256, 2
        %v835 = vsel %vm760, %v832, %v834
        %v836 = vrot.slane %v257, 2
        %v837 = vrot.slane %v258, 2
        %v838 = vsel %vm760, %v836, %v837
        %v839 = vrot.slane %v259, 2
        %v840 = vsel %vm760, %v837, %v839
        %s841 = scalar_lea.vmem %s1, 8
        %v842 = vld [vmem:[%s841] sm:$0xf]
        %v843 = vsel %vm398, %v763, 0
        %v845 = vsel %vm398, %v765, 0
        %v847 = vsel %vm398, %v768, 0
        %v849 = vsel %vm398, %v770, 0
        %v851 = vsel %vm398, %v773, 0
        %v853 = vsel %vm398, %v775, 0
        %v855 = vsel %vm398, %v778, 0
        %v857 = vsel %vm398, %v780, 0
        %v859 = vsel %vm398, %v783, 0
        %v861 = vsel %vm398, %v785, 0
        %v863 = vsel %vm398, %v788, 0
        %v865 = vsel %vm398, %v790, 0
        %v867 = vsel %vm398, %v793, 0
        %v869 = vsel %vm398, %v795, 0
        %v871 = vsel %vm398, %v798, 0
        %v873 = vsel %vm398, %v800, 0
        %v875 = vsel %vm398, %v803, 0
        %v877 = vsel %vm398, %v805, 0
        %v879 = vsel %vm398, %v808, 0
        %v881 = vsel %vm398, %v810, 0
        %v883 = vsel %vm398, %v813, 0
        %v885 = vsel %vm398, %v815, 0
        %v887 = vsel %vm398, %v818, 0
        %v889 = vsel %vm398, %v820, 0
        %v891 = vsel %vm398, %v823, 0
        %v893 = vsel %vm398, %v825, 0
        %v895 = vsel %vm398, %v828, 0
        %v897 = vsel %vm398, %v830, 0
        %v899 = vsel %vm398, %v833, 0
        %v901 = vsel %vm398, %v835, 0
        %v903 = vsel %vm398, %v838, 0
        %v905 = vsel %vm398, %v840, 0
        %v908 = vsel %vm463, %v842, 0
        %910 = vmatpush.msra.mxu0 0.0
        %911 = vmatpush.msra.mxu0 0.0
        %912 = vmatpush.msra.mxu0 0.0
        %913 = vmatpush.msra.mxu0 0.0
        %914 = vmatpush.msra.mxu0 0.0
        %915 = vmatpush.msra.mxu0 0.0
        %916 = vmatpush.msra.mxu0 0.0
        %917 = vmatpush.msra.mxu0 0.0
        %918 = vmatpush.msra.mxu0 0.0
        %919 = vmatpush.msra.mxu0 0.0
        %920 = vmatpush.msra.mxu0 0.0
        %921 = vmatpush.msra.mxu0 0.0
        %922 = vmatpush.msra.mxu0 0.0
        %923 = vmatpush.msra.mxu0 0.0
        %924 = vmatpush.msra.mxu0 0.0
        %925 = vmatpush.msra.mxu0 %v908
        %926 = vmatmul.f32.gmra.mxu0 %v843
        %v927 = vpop.f32.mrf.mxu0
        %v928 = vadd.f32 0.0, %v927
        %929 = vmatmul.f32.gmra.mxu0 %v845
        %v930 = vpop.f32.mrf.mxu0
        %v931 = vadd.f32 0.0, %v930
        %932 = vmatmul.f32.gmra.mxu0 %v847
        %v933 = vpop.f32.mrf.mxu0
        %v934 = vadd.f32 0.0, %v933
        %935 = vmatmul.f32.gmra.mxu0 %v849
        %v936 = vpop.f32.mrf.mxu0
        %v937 = vadd.f32 0.0, %v936
        %938 = vmatmul.f32.gmra.mxu0 %v851
        %v939 = vpop.f32.mrf.mxu0
        %v940 = vadd.f32 0.0, %v939
        %941 = vmatmul.f32.gmra.mxu0 %v853
        %v942 = vpop.f32.mrf.mxu0
        %v943 = vadd.f32 0.0, %v942
        %944 = vmatmul.f32.gmra.mxu0 %v855
        %v945 = vpop.f32.mrf.mxu0
        %v946 = vadd.f32 0.0, %v945
        %947 = vmatmul.f32.gmra.mxu0 %v857
        %v948 = vpop.f32.mrf.mxu0
        %v949 = vadd.f32 0.0, %v948
        %950 = vmatmul.f32.gmra.mxu0 %v859
        %v951 = vpop.f32.mrf.mxu0
        %v952 = vadd.f32 0.0, %v951
        %953 = vmatmul.f32.gmra.mxu0 %v861
        %v954 = vpop.f32.mrf.mxu0
        %v955 = vadd.f32 0.0, %v954
        %956 = vmatmul.f32.gmra.mxu0 %v863
        %v957 = vpop.f32.mrf.mxu0
        %v958 = vadd.f32 0.0, %v957
        %959 = vmatmul.f32.gmra.mxu0 %v865
        %v960 = vpop.f32.mrf.mxu0
        %v961 = vadd.f32 0.0, %v960
        %962 = vmatmul.f32.gmra.mxu0 %v867
        %v963 = vpop.f32.mrf.mxu0
        %v964 = vadd.f32 0.0, %v963
        %965 = vmatmul.f32.gmra.mxu0 %v869
        %v966 = vpop.f32.mrf.mxu0
        %v967 = vadd.f32 0.0, %v966
        %968 = vmatmul.f32.gmra.mxu0 %v871
        %v969 = vpop.f32.mrf.mxu0
        %v970 = vadd.f32 0.0, %v969
        %971 = vmatmul.f32.gmra.mxu0 %v873
        %v972 = vpop.f32.mrf.mxu0
        %v973 = vadd.f32 0.0, %v972
        %974 = vmatmul.f32.gmra.mxu0 %v875
        %v975 = vpop.f32.mrf.mxu0
        %v976 = vadd.f32 0.0, %v975
        %977 = vmatmul.f32.gmra.mxu0 %v877
        %v978 = vpop.f32.mrf.mxu0
        %v979 = vadd.f32 0.0, %v978
        %980 = vmatmul.f32.gmra.mxu0 %v879
        %v981 = vpop.f32.mrf.mxu0
        %v982 = vadd.f32 0.0, %v981
        %983 = vmatmul.f32.gmra.mxu0 %v881
        %v984 = vpop.f32.mrf.mxu0
        %v985 = vadd.f32 0.0, %v984
        %986 = vmatmul.f32.gmra.mxu0 %v883
        %v987 = vpop.f32.mrf.mxu0
        %v988 = vadd.f32 0.0, %v987
        %989 = vmatmul.f32.gmra.mxu0 %v885
        %v990 = vpop.f32.mrf.mxu0
        %v991 = vadd.f32 0.0, %v990
        %992 = vmatmul.f32.gmra.mxu0 %v887
        %v993 = vpop.f32.mrf.mxu0
        %v994 = vadd.f32 0.0, %v993
        %995 = vmatmul.f32.gmra.mxu0 %v889
        %v996 = vpop.f32.mrf.mxu0
        %v997 = vadd.f32 0.0, %v996
        %998 = vmatmul.f32.gmra.mxu0 %v891
        %v999 = vpop.f32.mrf.mxu0
        %v1000 = vadd.f32 0.0, %v999
        %1001 = vmatmul.f32.gmra.mxu0 %v893
        %v1002 = vpop.f32.mrf.mxu0
        %v1003 = vadd.f32 0.0, %v1002
        %1004 = vmatmul.f32.gmra.mxu0 %v895
        %v1005 = vpop.f32.mrf.mxu0
        %v1006 = vadd.f32 0.0, %v1005
        %1007 = vmatmul.f32.gmra.mxu0 %v897
        %v1008 = vpop.f32.mrf.mxu0
        %v1009 = vadd.f32 0.0, %v1008
        %1010 = vmatmul.f32.gmra.mxu0 %v899
        %v1011 = vpop.f32.mrf.mxu0
        %v1012 = vadd.f32 0.0, %v1011
        %1013 = vmatmul.f32.gmra.mxu0 %v901
        %v1014 = vpop.f32.mrf.mxu0
        %v1015 = vadd.f32 0.0, %v1014
        %1016 = vmatmul.f32.gmra.mxu0 %v903
        %v1017 = vpop.f32.mrf.mxu0
        %v1018 = vadd.f32 0.0, %v1017
        %1019 = vmatmul.f32.gmra.mxu0 %v905
        %v1020 = vpop.f32.mrf.mxu0
        %v1021 = vadd.f32 0.0, %v1020
        %1022 = vdwg.mxu0
        %v1023 = vadd.f32 %v665, %v928
        %v1024 = vadd.f32 %v668, %v931
        %v1025 = vadd.f32 %v671, %v934
        %v1026 = vadd.f32 %v674, %v937
        %v1027 = vadd.f32 %v677, %v940
        %v1028 = vadd.f32 %v680, %v943
        %v1029 = vadd.f32 %v683, %v946
        %v1030 = vadd.f32 %v686, %v949
        %v1031 = vadd.f32 %v689, %v952
        %v1032 = vadd.f32 %v692, %v955
        %v1033 = vadd.f32 %v695, %v958
        %v1034 = vadd.f32 %v698, %v961
        %v1035 = vadd.f32 %v701, %v964
        %v1036 = vadd.f32 %v704, %v967
        %v1037 = vadd.f32 %v707, %v970
        %v1038 = vadd.f32 %v710, %v973
        %v1039 = vadd.f32 %v713, %v976
        %v1040 = vadd.f32 %v716, %v979
        %v1041 = vadd.f32 %v719, %v982
        %v1042 = vadd.f32 %v722, %v985
        %v1043 = vadd.f32 %v725, %v988
        %v1044 = vadd.f32 %v728, %v991
        %v1045 = vadd.f32 %v731, %v994
        %v1046 = vadd.f32 %v734, %v997
        %v1047 = vadd.f32 %v737, %v1000
        %v1048 = vadd.f32 %v740, %v1003
        %v1049 = vadd.f32 %v743, %v1006
        %v1050 = vadd.f32 %v746, %v1009
        %v1051 = vadd.f32 %v749, %v1012
        %v1052 = vadd.f32 %v752, %v1015
        %v1053 = vadd.f32 %v755, %v1018
        %v1054 = vadd.f32 %v758, %v1021
        %s1055 = scalar_lea.vmem %s1, 12
        %v1056 = vld [vmem:[%s1055] sm:$0xf]
        %v1058 = vsel %vm398, %v260, 0
        %v1061 = vsel %vm398, %v261, 0
        %v1064 = vsel %vm463, %v1056, 0
        %1066 = vmatpush.msra.mxu0 0.0
        %1067 = vmatpush.msra.mxu0 0.0
        %1068 = vmatpush.msra.mxu0 0.0
        %1069 = vmatpush.msra.mxu0 0.0
        %1070 = vmatpush.msra.mxu0 0.0
        %1071 = vmatpush.msra.mxu0 0.0
        %1072 = vmatpush.msra.mxu0 0.0
        %1073 = vmatpush.msra.mxu0 0.0
        %1074 = vmatpush.msra.mxu0 0.0
        %1075 = vmatpush.msra.mxu0 0.0
        %1076 = vmatpush.msra.mxu0 0.0
        %1077 = vmatpush.msra.mxu0 0.0
        %1078 = vmatpush.msra.mxu0 0.0
        %1079 = vmatpush.msra.mxu0 0.0
        %1080 = vmatpush.msra.mxu0 0.0
        %1081 = vmatpush.msra.mxu0 %v1064
        %1082 = vmatmul.f32.gmra.mxu0 %v584
        %v1083 = vpop.f32.mrf.mxu0
        %v1084 = vadd.f32 0.0, %v1083
        %1085 = vmatmul.f32.gmra.mxu0 %v586
        %v1086 = vpop.f32.mrf.mxu0
        %v1087 = vadd.f32 0.0, %v1086
        %1088 = vmatmul.f32.gmra.mxu0 %v588
        %v1089 = vpop.f32.mrf.mxu0
        %v1090 = vadd.f32 0.0, %v1089
        %1091 = vmatmul.f32.gmra.mxu0 %v590
        %v1092 = vpop.f32.mrf.mxu0
        %v1093 = vadd.f32 0.0, %v1092
        %1094 = vmatmul.f32.gmra.mxu0 %v592
        %v1095 = vpop.f32.mrf.mxu0
        %v1096 = vadd.f32 0.0, %v1095
        %1097 = vmatmul.f32.gmra.mxu0 %v594
        %v1098 = vpop.f32.mrf.mxu0
        %v1099 = vadd.f32 0.0, %v1098
        %1100 = vmatmul.f32.gmra.mxu0 %v596
        %v1101 = vpop.f32.mrf.mxu0
        %v1102 = vadd.f32 0.0, %v1101
        %1103 = vmatmul.f32.gmra.mxu0 %v598
        %v1104 = vpop.f32.mrf.mxu0
        %v1105 = vadd.f32 0.0, %v1104
        %1106 = vmatmul.f32.gmra.mxu0 %v600
        %v1107 = vpop.f32.mrf.mxu0
        %v1108 = vadd.f32 0.0, %v1107
        %1109 = vmatmul.f32.gmra.mxu0 %v602
        %v1110 = vpop.f32.mrf.mxu0
        %v1111 = vadd.f32 0.0, %v1110
        %1112 = vmatmul.f32.gmra.mxu0 %v604
        %v1113 = vpop.f32.mrf.mxu0
        %v1114 = vadd.f32 0.0, %v1113
        %1115 = vmatmul.f32.gmra.mxu0 %v606
        %v1116 = vpop.f32.mrf.mxu0
        %v1117 = vadd.f32 0.0, %v1116
        %1118 = vmatmul.f32.gmra.mxu0 %v608
        %v1119 = vpop.f32.mrf.mxu0
        %v1120 = vadd.f32 0.0, %v1119
        %1121 = vmatmul.f32.gmra.mxu0 %v610
        %v1122 = vpop.f32.mrf.mxu0
        %v1123 = vadd.f32 0.0, %v1122
        %1124 = vmatmul.f32.gmra.mxu0 %v612
        %v1125 = vpop.f32.mrf.mxu0
        %v1126 = vadd.f32 0.0, %v1125
        %1127 = vmatmul.f32.gmra.mxu0 %v614
        %v1128 = vpop.f32.mrf.mxu0
        %v1129 = vadd.f32 0.0, %v1128
        %1130 = vmatmul.f32.gmra.mxu0 %v616
        %v1131 = vpop.f32.mrf.mxu0
        %v1132 = vadd.f32 0.0, %v1131
        %1133 = vmatmul.f32.gmra.mxu0 %v618
        %v1134 = vpop.f32.mrf.mxu0
        %v1135 = vadd.f32 0.0, %v1134
        %1136 = vmatmul.f32.gmra.mxu0 %v620
        %v1137 = vpop.f32.mrf.mxu0
        %v1138 = vadd.f32 0.0, %v1137
        %1139 = vmatmul.f32.gmra.mxu0 %v622
        %v1140 = vpop.f32.mrf.mxu0
        %v1141 = vadd.f32 0.0, %v1140
        %1142 = vmatmul.f32.gmra.mxu0 %v624
        %v1143 = vpop.f32.mrf.mxu0
        %v1144 = vadd.f32 0.0, %v1143
        %1145 = vmatmul.f32.gmra.mxu0 %v626
        %v1146 = vpop.f32.mrf.mxu0
        %v1147 = vadd.f32 0.0, %v1146
        %1148 = vmatmul.f32.gmra.mxu0 %v628
        %v1149 = vpop.f32.mrf.mxu0
        %v1150 = vadd.f32 0.0, %v1149
        %1151 = vmatmul.f32.gmra.mxu0 %v630
        %v1152 = vpop.f32.mrf.mxu0
        %v1153 = vadd.f32 0.0, %v1152
        %1154 = vmatmul.f32.gmra.mxu0 %v632
        %v1155 = vpop.f32.mrf.mxu0
        %v1156 = vadd.f32 0.0, %v1155
        %1157 = vmatmul.f32.gmra.mxu0 %v634
        %v1158 = vpop.f32.mrf.mxu0
        %v1159 = vadd.f32 0.0, %v1158
        %1160 = vmatmul.f32.gmra.mxu0 %v636
        %v1161 = vpop.f32.mrf.mxu0
        %v1162 = vadd.f32 0.0, %v1161
        %1163 = vmatmul.f32.gmra.mxu0 %v638
        %v1164 = vpop.f32.mrf.mxu0
        %v1165 = vadd.f32 0.0, %v1164
        %1166 = vmatmul.f32.gmra.mxu0 %v640
        %v1167 = vpop.f32.mrf.mxu0
        %v1168 = vadd.f32 0.0, %v1167
        %1169 = vmatmul.f32.gmra.mxu0 %v642
        %v1170 = vpop.f32.mrf.mxu0
        %v1171 = vadd.f32 0.0, %v1170
        %1172 = vmatmul.f32.gmra.mxu0 %v1058
        %v1173 = vpop.f32.mrf.mxu0
        %v1174 = vadd.f32 0.0, %v1173
        %1175 = vmatmul.f32.gmra.mxu0 %v1061
        %v1176 = vpop.f32.mrf.mxu0
        %v1177 = vadd.f32 0.0, %v1176
        %1178 = vdwg.mxu0
        %v1179 = vadd.f32 %v1023, %v1084
        %v1180 = vadd.f32 %v1024, %v1087
        %v1181 = vadd.f32 %v1025, %v1090
        %v1182 = vadd.f32 %v1026, %v1093
        %v1183 = vadd.f32 %v1027, %v1096
        %v1184 = vadd.f32 %v1028, %v1099
        %v1185 = vadd.f32 %v1029, %v1102
        %v1186 = vadd.f32 %v1030, %v1105
        %v1187 = vadd.f32 %v1031, %v1108
        %v1188 = vadd.f32 %v1032, %v1111
        %v1189 = vadd.f32 %v1033, %v1114
        %v1190 = vadd.f32 %v1034, %v1117
        %v1191 = vadd.f32 %v1035, %v1120
        %v1192 = vadd.f32 %v1036, %v1123
        %v1193 = vadd.f32 %v1037, %v1126
        %v1194 = vadd.f32 %v1038, %v1129
        %v1195 = vadd.f32 %v1039, %v1132
        %v1196 = vadd.f32 %v1040, %v1135
        %v1197 = vadd.f32 %v1041, %v1138
        %v1198 = vadd.f32 %v1042, %v1141
        %v1199 = vadd.f32 %v1043, %v1144
        %v1200 = vadd.f32 %v1044, %v1147
        %v1201 = vadd.f32 %v1045, %v1150
        %v1202 = vadd.f32 %v1046, %v1153
        %v1203 = vadd.f32 %v1047, %v1156
        %v1204 = vadd.f32 %v1048, %v1159
        %v1205 = vadd.f32 %v1049, %v1162
        %v1206 = vadd.f32 %v1050, %v1165
        %v1207 = vadd.f32 %v1051, %v1168
        %v1208 = vadd.f32 %v1052, %v1171
        %v1209 = vadd.f32 %v1053, %v1174
        %v1210 = vadd.f32 %v1054, %v1177
        %v1212 = vrot.slane %v260, 1
        %v1213 = vrot.slane %v261, 1
        %v1214 = vsel %vm315, %v1212, %v1213
        %v1215 = vrot.slane %v262, 1
        %v1216 = vsel %vm315, %v1213, %v1215
        %s1217 = scalar_lea.vmem %s1, 16
        %v1218 = vld [vmem:[%s1217] sm:$0xf]
        %v1219 = vsel %vm398, %v1214, 0
        %v1221 = vsel %vm398, %v1216, 0
        %v1224 = vsel %vm463, %v1218, 0
        %1226 = vmatpush.msra.mxu0 0.0
        %1227 = vmatpush.msra.mxu0 0.0
        %1228 = vmatpush.msra.mxu0 0.0
        %1229 = vmatpush.msra.mxu0 0.0
        %1230 = vmatpush.msra.mxu0 0.0
        %1231 = vmatpush.msra.mxu0 0.0
        %1232 = vmatpush.msra.mxu0 0.0
        %1233 = vmatpush.msra.mxu0 0.0
        %1234 = vmatpush.msra.mxu0 0.0
        %1235 = vmatpush.msra.mxu0 0.0
        %1236 = vmatpush.msra.mxu0 0.0
        %1237 = vmatpush.msra.mxu0 0.0
        %1238 = vmatpush.msra.mxu0 0.0
        %1239 = vmatpush.msra.mxu0 0.0
        %1240 = vmatpush.msra.mxu0 0.0
        %1241 = vmatpush.msra.mxu0 %v1224
        %1242 = vmatmul.f32.gmra.mxu0 %v403
        %v1243 = vpop.f32.mrf.mxu0
        %v1244 = vadd.f32 0.0, %v1243
        %1245 = vmatmul.f32.gmra.mxu0 %v405
        %v1246 = vpop.f32.mrf.mxu0
        %v1247 = vadd.f32 0.0, %v1246
        %1248 = vmatmul.f32.gmra.mxu0 %v407
        %v1249 = vpop.f32.mrf.mxu0
        %v1250 = vadd.f32 0.0, %v1249
        %1251 = vmatmul.f32.gmra.mxu0 %v409
        %v1252 = vpop.f32.mrf.mxu0
        %v1253 = vadd.f32 0.0, %v1252
        %1254 = vmatmul.f32.gmra.mxu0 %v411
        %v1255 = vpop.f32.mrf.mxu0
        %v1256 = vadd.f32 0.0, %v1255
        %1257 = vmatmul.f32.gmra.mxu0 %v413
        %v1258 = vpop.f32.mrf.mxu0
        %v1259 = vadd.f32 0.0, %v1258
        %1260 = vmatmul.f32.gmra.mxu0 %v415
        %v1261 = vpop.f32.mrf.mxu0
        %v1262 = vadd.f32 0.0, %v1261
        %1263 = vmatmul.f32.gmra.mxu0 %v417
        %v1264 = vpop.f32.mrf.mxu0
        %v1265 = vadd.f32 0.0, %v1264
        %1266 = vmatmul.f32.gmra.mxu0 %v419
        %v1267 = vpop.f32.mrf.mxu0
        %v1268 = vadd.f32 0.0, %v1267
        %1269 = vmatmul.f32.gmra.mxu0 %v421
        %v1270 = vpop.f32.mrf.mxu0
        %v1271 = vadd.f32 0.0, %v1270
        %1272 = vmatmul.f32.gmra.mxu0 %v423
        %v1273 = vpop.f32.mrf.mxu0
        %v1274 = vadd.f32 0.0, %v1273
        %1275 = vmatmul.f32.gmra.mxu0 %v425
        %v1276 = vpop.f32.mrf.mxu0
        %v1277 = vadd.f32 0.0, %v1276
        %1278 = vmatmul.f32.gmra.mxu0 %v427
        %v1279 = vpop.f32.mrf.mxu0
        %v1280 = vadd.f32 0.0, %v1279
        %1281 = vmatmul.f32.gmra.mxu0 %v429
        %v1282 = vpop.f32.mrf.mxu0
        %v1283 = vadd.f32 0.0, %v1282
        %1284 = vmatmul.f32.gmra.mxu0 %v431
        %v1285 = vpop.f32.mrf.mxu0
        %v1286 = vadd.f32 0.0, %v1285
        %1287 = vmatmul.f32.gmra.mxu0 %v433
        %v1288 = vpop.f32.mrf.mxu0
        %v1289 = vadd.f32 0.0, %v1288
        %1290 = vmatmul.f32.gmra.mxu0 %v435
        %v1291 = vpop.f32.mrf.mxu0
        %v1292 = vadd.f32 0.0, %v1291
        %1293 = vmatmul.f32.gmra.mxu0 %v437
        %v1294 = vpop.f32.mrf.mxu0
        %v1295 = vadd.f32 0.0, %v1294
        %1296 = vmatmul.f32.gmra.mxu0 %v439
        %v1297 = vpop.f32.mrf.mxu0
        %v1298 = vadd.f32 0.0, %v1297
        %1299 = vmatmul.f32.gmra.mxu0 %v441
        %v1300 = vpop.f32.mrf.mxu0
        %v1301 = vadd.f32 0.0, %v1300
        %1302 = vmatmul.f32.gmra.mxu0 %v443
        %v1303 = vpop.f32.mrf.mxu0
        %v1304 = vadd.f32 0.0, %v1303
        %1305 = vmatmul.f32.gmra.mxu0 %v445
        %v1306 = vpop.f32.mrf.mxu0
        %v1307 = vadd.f32 0.0, %v1306
        %1308 = vmatmul.f32.gmra.mxu0 %v447
        %v1309 = vpop.f32.mrf.mxu0
        %v1310 = vadd.f32 0.0, %v1309
        %1311 = vmatmul.f32.gmra.mxu0 %v449
        %v1312 = vpop.f32.mrf.mxu0
        %v1313 = vadd.f32 0.0, %v1312
        %1314 = vmatmul.f32.gmra.mxu0 %v451
        %v1315 = vpop.f32.mrf.mxu0
        %v1316 = vadd.f32 0.0, %v1315
        %1317 = vmatmul.f32.gmra.mxu0 %v453
        %v1318 = vpop.f32.mrf.mxu0
        %v1319 = vadd.f32 0.0, %v1318
        %1320 = vmatmul.f32.gmra.mxu0 %v455
        %v1321 = vpop.f32.mrf.mxu0
        %v1322 = vadd.f32 0.0, %v1321
        %1323 = vmatmul.f32.gmra.mxu0 %v457
        %v1324 = vpop.f32.mrf.mxu0
        %v1325 = vadd.f32 0.0, %v1324
        %1326 = vmatmul.f32.gmra.mxu0 %v459
        %v1327 = vpop.f32.mrf.mxu0
        %v1328 = vadd.f32 0.0, %v1327
        %1329 = vmatmul.f32.gmra.mxu0 %v461
        %v1330 = vpop.f32.mrf.mxu0
        %v1331 = vadd.f32 0.0, %v1330
        %1332 = vmatmul.f32.gmra.mxu0 %v1219
        %v1333 = vpop.f32.mrf.mxu0
        %v1334 = vadd.f32 0.0, %v1333
        %1335 = vmatmul.f32.gmra.mxu0 %v1221
        %v1336 = vpop.f32.mrf.mxu0
        %v1337 = vadd.f32 0.0, %v1336
        %1338 = vdwg.mxu0
        %v1339 = vadd.f32 %v1179, %v1244
        %v1340 = vadd.f32 %v1180, %v1247
        %v1341 = vadd.f32 %v1181, %v1250
        %v1342 = vadd.f32 %v1182, %v1253
        %v1343 = vadd.f32 %v1183, %v1256
        %v1344 = vadd.f32 %v1184, %v1259
        %v1345 = vadd.f32 %v1185, %v1262
        %v1346 = vadd.f32 %v1186, %v1265
        %v1347 = vadd.f32 %v1187, %v1268
        %v1348 = vadd.f32 %v1188, %v1271
        %v1349 = vadd.f32 %v1189, %v1274
        %v1350 = vadd.f32 %v1190, %v1277
        %v1351 = vadd.f32 %v1191, %v1280
        %v1352 = vadd.f32 %v1192, %v1283
        %v1353 = vadd.f32 %v1193, %v1286
        %v1354 = vadd.f32 %v1194, %v1289
        %v1355 = vadd.f32 %v1195, %v1292
        %v1356 = vadd.f32 %v1196, %v1295
        %v1357 = vadd.f32 %v1197, %v1298
        %v1358 = vadd.f32 %v1198, %v1301
        %v1359 = vadd.f32 %v1199, %v1304
        %v1360 = vadd.f32 %v1200, %v1307
        %v1361 = vadd.f32 %v1201, %v1310
        %v1362 = vadd.f32 %v1202, %v1313
        %v1363 = vadd.f32 %v1203, %v1316
        %v1364 = vadd.f32 %v1204, %v1319
        %v1365 = vadd.f32 %v1205, %v1322
        %v1366 = vadd.f32 %v1206, %v1325
        %v1367 = vadd.f32 %v1207, %v1328
        %v1368 = vadd.f32 %v1208, %v1331
        %v1369 = vadd.f32 %v1209, %v1334
        %v1370 = vadd.f32 %v1210, %v1337
        %v1371 = vrot.slane %v260, 2
        %v1372 = vrot.slane %v261, 2
        %v1373 = vsel %vm760, %v1371, %v1372
        %v1374 = vrot.slane %v262, 2
        %v1375 = vsel %vm760, %v1372, %v1374
        %s1376 = scalar_lea.vmem %s1, 20
        %v1377 = vld [vmem:[%s1376] sm:$0xf]
        %v1378 = vsel %vm398, %v1373, 0
        %v1380 = vsel %vm398, %v1375, 0
        %v1383 = vsel %vm463, %v1377, 0
        %1385 = vmatpush.msra.mxu0 0.0
        %1386 = vmatpush.msra.mxu0 0.0
        %1387 = vmatpush.msra.mxu0 0.0
        %1388 = vmatpush.msra.mxu0 0.0
        %1389 = vmatpush.msra.mxu0 0.0
        %1390 = vmatpush.msra.mxu0 0.0
        %1391 = vmatpush.msra.mxu0 0.0
        %1392 = vmatpush.msra.mxu0 0.0
        %1393 = vmatpush.msra.mxu0 0.0
        %1394 = vmatpush.msra.mxu0 0.0
        %1395 = vmatpush.msra.mxu0 0.0
        %1396 = vmatpush.msra.mxu0 0.0
        %1397 = vmatpush.msra.mxu0 0.0
        %1398 = vmatpush.msra.mxu0 0.0
        %1399 = vmatpush.msra.mxu0 0.0
        %1400 = vmatpush.msra.mxu0 %v1383
        %1401 = vmatmul.f32.gmra.mxu0 %v847
        %v1402 = vpop.f32.mrf.mxu0
        %v1403 = vadd.f32 0.0, %v1402
        %1404 = vmatmul.f32.gmra.mxu0 %v849
        %v1405 = vpop.f32.mrf.mxu0
        %v1406 = vadd.f32 0.0, %v1405
        %1407 = vmatmul.f32.gmra.mxu0 %v851
        %v1408 = vpop.f32.mrf.mxu0
        %v1409 = vadd.f32 0.0, %v1408
        %1410 = vmatmul.f32.gmra.mxu0 %v853
        %v1411 = vpop.f32.mrf.mxu0
        %v1412 = vadd.f32 0.0, %v1411
        %1413 = vmatmul.f32.gmra.mxu0 %v855
        %v1414 = vpop.f32.mrf.mxu0
        %v1415 = vadd.f32 0.0, %v1414
        %1416 = vmatmul.f32.gmra.mxu0 %v857
        %v1417 = vpop.f32.mrf.mxu0
        %v1418 = vadd.f32 0.0, %v1417
        %1419 = vmatmul.f32.gmra.mxu0 %v859
        %v1420 = vpop.f32.mrf.mxu0
        %v1421 = vadd.f32 0.0, %v1420
        %1422 = vmatmul.f32.gmra.mxu0 %v861
        %v1423 = vpop.f32.mrf.mxu0
        %v1424 = vadd.f32 0.0, %v1423
        %1425 = vmatmul.f32.gmra.mxu0 %v863
        %v1426 = vpop.f32.mrf.mxu0
        %v1427 = vadd.f32 0.0, %v1426
        %1428 = vmatmul.f32.gmra.mxu0 %v865
        %v1429 = vpop.f32.mrf.mxu0
        %v1430 = vadd.f32 0.0, %v1429
        %1431 = vmatmul.f32.gmra.mxu0 %v867
        %v1432 = vpop.f32.mrf.mxu0
        %v1433 = vadd.f32 0.0, %v1432
        %1434 = vmatmul.f32.gmra.mxu0 %v869
        %v1435 = vpop.f32.mrf.mxu0
        %v1436 = vadd.f32 0.0, %v1435
        %1437 = vmatmul.f32.gmra.mxu0 %v871
        %v1438 = vpop.f32.mrf.mxu0
        %v1439 = vadd.f32 0.0, %v1438
        %1440 = vmatmul.f32.gmra.mxu0 %v873
        %v1441 = vpop.f32.mrf.mxu0
        %v1442 = vadd.f32 0.0, %v1441
        %1443 = vmatmul.f32.gmra.mxu0 %v875
        %v1444 = vpop.f32.mrf.mxu0
        %v1445 = vadd.f32 0.0, %v1444
        %1446 = vmatmul.f32.gmra.mxu0 %v877
        %v1447 = vpop.f32.mrf.mxu0
        %v1448 = vadd.f32 0.0, %v1447
        %1449 = vmatmul.f32.gmra.mxu0 %v879
        %v1450 = vpop.f32.mrf.mxu0
        %v1451 = vadd.f32 0.0, %v1450
        %1452 = vmatmul.f32.gmra.mxu0 %v881
        %v1453 = vpop.f32.mrf.mxu0
        %v1454 = vadd.f32 0.0, %v1453
        %1455 = vmatmul.f32.gmra.mxu0 %v883
        %v1456 = vpop.f32.mrf.mxu0
        %v1457 = vadd.f32 0.0, %v1456
        %1458 = vmatmul.f32.gmra.mxu0 %v885
        %v1459 = vpop.f32.mrf.mxu0
        %v1460 = vadd.f32 0.0, %v1459
        %1461 = vmatmul.f32.gmra.mxu0 %v887
        %v1462 = vpop.f32.mrf.mxu0
        %v1463 = vadd.f32 0.0, %v1462
        %1464 = vmatmul.f32.gmra.mxu0 %v889
        %v1465 = vpop.f32.mrf.mxu0
        %v1466 = vadd.f32 0.0, %v1465
        %1467 = vmatmul.f32.gmra.mxu0 %v891
        %v1468 = vpop.f32.mrf.mxu0
        %v1469 = vadd.f32 0.0, %v1468
        %1470 = vmatmul.f32.gmra.mxu0 %v893
        %v1471 = vpop.f32.mrf.mxu0
        %v1472 = vadd.f32 0.0, %v1471
        %1473 = vmatmul.f32.gmra.mxu0 %v895
        %v1474 = vpop.f32.mrf.mxu0
        %v1475 = vadd.f32 0.0, %v1474
        %1476 = vmatmul.f32.gmra.mxu0 %v897
        %v1477 = vpop.f32.mrf.mxu0
        %v1478 = vadd.f32 0.0, %v1477
        %1479 = vmatmul.f32.gmra.mxu0 %v899
        %v1480 = vpop.f32.mrf.mxu0
        %v1481 = vadd.f32 0.0, %v1480
        %1482 = vmatmul.f32.gmra.mxu0 %v901
        %v1483 = vpop.f32.mrf.mxu0
        %v1484 = vadd.f32 0.0, %v1483
        %1485 = vmatmul.f32.gmra.mxu0 %v903
        %v1486 = vpop.f32.mrf.mxu0
        %v1487 = vadd.f32 0.0, %v1486
        %1488 = vmatmul.f32.gmra.mxu0 %v905
        %v1489 = vpop.f32.mrf.mxu0
        %v1490 = vadd.f32 0.0, %v1489
        %1491 = vmatmul.f32.gmra.mxu0 %v1378
        %v1492 = vpop.f32.mrf.mxu0
        %v1493 = vadd.f32 0.0, %v1492
        %1494 = vmatmul.f32.gmra.mxu0 %v1380
        %v1495 = vpop.f32.mrf.mxu0
        %v1496 = vadd.f32 0.0, %v1495
        %1497 = vdwg.mxu0
        %v1498 = vadd.f32 %v1339, %v1403
        %v1499 = vadd.f32 %v1340, %v1406
        %v1500 = vadd.f32 %v1341, %v1409
        %v1501 = vadd.f32 %v1342, %v1412
        %v1502 = vadd.f32 %v1343, %v1415
        %v1503 = vadd.f32 %v1344, %v1418
        %v1504 = vadd.f32 %v1345, %v1421
        %v1505 = vadd.f32 %v1346, %v1424
        %v1506 = vadd.f32 %v1347, %v1427
        %v1507 = vadd.f32 %v1348, %v1430
        %v1508 = vadd.f32 %v1349, %v1433
        %v1509 = vadd.f32 %v1350, %v1436
        %v1510 = vadd.f32 %v1351, %v1439
        %v1511 = vadd.f32 %v1352, %v1442
        %v1512 = vadd.f32 %v1353, %v1445
        %v1513 = vadd.f32 %v1354, %v1448
        %v1514 = vadd.f32 %v1355, %v1451
        %v1515 = vadd.f32 %v1356, %v1454
        %v1516 = vadd.f32 %v1357, %v1457
        %v1517 = vadd.f32 %v1358, %v1460
        %v1518 = vadd.f32 %v1359, %v1463
        %v1519 = vadd.f32 %v1360, %v1466
        %v1520 = vadd.f32 %v1361, %v1469
        %v1521 = vadd.f32 %v1362, %v1472
        %v1522 = vadd.f32 %v1363, %v1475
        %v1523 = vadd.f32 %v1364, %v1478
        %v1524 = vadd.f32 %v1365, %v1481
        %v1525 = vadd.f32 %v1366, %v1484
        %v1526 = vadd.f32 %v1367, %v1487
        %v1527 = vadd.f32 %v1368, %v1490
        %v1528 = vadd.f32 %v1369, %v1493
        %v1529 = vadd.f32 %v1370, %v1496
        %s1530 = scalar_lea.vmem %s1, 24
        %v1531 = vld [vmem:[%s1530] sm:$0xf]
        %v1533 = vsel %vm398, %v263, 0
        %v1536 = vsel %vm398, %v264, 0
        %v1539 = vsel %vm463, %v1531, 0
        %1541 = vmatpush.msra.mxu0 0.0
        %1542 = vmatpush.msra.mxu0 0.0
        %1543 = vmatpush.msra.mxu0 0.0
        %1544 = vmatpush.msra.mxu0 0.0
        %1545 = vmatpush.msra.mxu0 0.0
        %1546 = vmatpush.msra.mxu0 0.0
        %1547 = vmatpush.msra.mxu0 0.0
        %1548 = vmatpush.msra.mxu0 0.0
        %1549 = vmatpush.msra.mxu0 0.0
        %1550 = vmatpush.msra.mxu0 0.0
        %1551 = vmatpush.msra.mxu0 0.0
        %1552 = vmatpush.msra.mxu0 0.0
        %1553 = vmatpush.msra.mxu0 0.0
        %1554 = vmatpush.msra.mxu0 0.0
        %1555 = vmatpush.msra.mxu0 0.0
        %1556 = vmatpush.msra.mxu0 %v1539
        %1557 = vmatmul.f32.gmra.mxu0 %v588
        %v1558 = vpop.f32.mrf.mxu0
        %v1559 = vadd.f32 0.0, %v1558
        %1560 = vmatmul.f32.gmra.mxu0 %v590
        %v1561 = vpop.f32.mrf.mxu0
        %v1562 = vadd.f32 0.0, %v1561
        %1563 = vmatmul.f32.gmra.mxu0 %v592
        %v1564 = vpop.f32.mrf.mxu0
        %v1565 = vadd.f32 0.0, %v1564
        %1566 = vmatmul.f32.gmra.mxu0 %v594
        %v1567 = vpop.f32.mrf.mxu0
        %v1568 = vadd.f32 0.0, %v1567
        %1569 = vmatmul.f32.gmra.mxu0 %v596
        %v1570 = vpop.f32.mrf.mxu0
        %v1571 = vadd.f32 0.0, %v1570
        %1572 = vmatmul.f32.gmra.mxu0 %v598
        %v1573 = vpop.f32.mrf.mxu0
        %v1574 = vadd.f32 0.0, %v1573
        %1575 = vmatmul.f32.gmra.mxu0 %v600
        %v1576 = vpop.f32.mrf.mxu0
        %v1577 = vadd.f32 0.0, %v1576
        %1578 = vmatmul.f32.gmra.mxu0 %v602
        %v1579 = vpop.f32.mrf.mxu0
        %v1580 = vadd.f32 0.0, %v1579
        %1581 = vmatmul.f32.gmra.mxu0 %v604
        %v1582 = vpop.f32.mrf.mxu0
        %v1583 = vadd.f32 0.0, %v1582
        %1584 = vmatmul.f32.gmra.mxu0 %v606
        %v1585 = vpop.f32.mrf.mxu0
        %v1586 = vadd.f32 0.0, %v1585
        %1587 = vmatmul.f32.gmra.mxu0 %v608
        %v1588 = vpop.f32.mrf.mxu0
        %v1589 = vadd.f32 0.0, %v1588
        %1590 = vmatmul.f32.gmra.mxu0 %v610
        %v1591 = vpop.f32.mrf.mxu0
        %v1592 = vadd.f32 0.0, %v1591
        %1593 = vmatmul.f32.gmra.mxu0 %v612
        %v1594 = vpop.f32.mrf.mxu0
        %v1595 = vadd.f32 0.0, %v1594
        %1596 = vmatmul.f32.gmra.mxu0 %v614
        %v1597 = vpop.f32.mrf.mxu0
        %v1598 = vadd.f32 0.0, %v1597
        %1599 = vmatmul.f32.gmra.mxu0 %v616
        %v1600 = vpop.f32.mrf.mxu0
        %v1601 = vadd.f32 0.0, %v1600
        %1602 = vmatmul.f32.gmra.mxu0 %v618
        %v1603 = vpop.f32.mrf.mxu0
        %v1604 = vadd.f32 0.0, %v1603
        %1605 = vmatmul.f32.gmra.mxu0 %v620
        %v1606 = vpop.f32.mrf.mxu0
        %v1607 = vadd.f32 0.0, %v1606
        %1608 = vmatmul.f32.gmra.mxu0 %v622
        %v1609 = vpop.f32.mrf.mxu0
        %v1610 = vadd.f32 0.0, %v1609
        %1611 = vmatmul.f32.gmra.mxu0 %v624
        %v1612 = vpop.f32.mrf.mxu0
        %v1613 = vadd.f32 0.0, %v1612
        %1614 = vmatmul.f32.gmra.mxu0 %v626
        %v1615 = vpop.f32.mrf.mxu0
        %v1616 = vadd.f32 0.0, %v1615
        %1617 = vmatmul.f32.gmra.mxu0 %v628
        %v1618 = vpop.f32.mrf.mxu0
        %v1619 = vadd.f32 0.0, %v1618
        %1620 = vmatmul.f32.gmra.mxu0 %v630
        %v1621 = vpop.f32.mrf.mxu0
        %v1622 = vadd.f32 0.0, %v1621
        %1623 = vmatmul.f32.gmra.mxu0 %v632
        %v1624 = vpop.f32.mrf.mxu0
        %v1625 = vadd.f32 0.0, %v1624
        %1626 = vmatmul.f32.gmra.mxu0 %v634
        %v1627 = vpop.f32.mrf.mxu0
        %v1628 = vadd.f32 0.0, %v1627
        %1629 = vmatmul.f32.gmra.mxu0 %v636
        %v1630 = vpop.f32.mrf.mxu0
        %v1631 = vadd.f32 0.0, %v1630
        %1632 = vmatmul.f32.gmra.mxu0 %v638
        %v1633 = vpop.f32.mrf.mxu0
        %v1634 = vadd.f32 0.0, %v1633
        %1635 = vmatmul.f32.gmra.mxu0 %v640
        %v1636 = vpop.f32.mrf.mxu0
        %v1637 = vadd.f32 0.0, %v1636
        %1638 = vmatmul.f32.gmra.mxu0 %v642
        %v1639 = vpop.f32.mrf.mxu0
        %v1640 = vadd.f32 0.0, %v1639
        %1641 = vmatmul.f32.gmra.mxu0 %v1058
        %v1642 = vpop.f32.mrf.mxu0
        %v1643 = vadd.f32 0.0, %v1642
        %1644 = vmatmul.f32.gmra.mxu0 %v1061
        %v1645 = vpop.f32.mrf.mxu0
        %v1646 = vadd.f32 0.0, %v1645
        %1647 = vmatmul.f32.gmra.mxu0 %v1533
        %v1648 = vpop.f32.mrf.mxu0
        %v1649 = vadd.f32 0.0, %v1648
        %1650 = vmatmul.f32.gmra.mxu0 %v1536
        %v1651 = vpop.f32.mrf.mxu0
        %v1652 = vadd.f32 0.0, %v1651
        %1653 = vdwg.mxu0
        %v1654 = vadd.f32 %v1498, %v1559
        %v1655 = vadd.f32 %v1499, %v1562
        %v1656 = vadd.f32 %v1500, %v1565
        %v1657 = vadd.f32 %v1501, %v1568
        %v1658 = vadd.f32 %v1502, %v1571
        %v1659 = vadd.f32 %v1503, %v1574
        %v1660 = vadd.f32 %v1504, %v1577
        %v1661 = vadd.f32 %v1505, %v1580
        %v1662 = vadd.f32 %v1506, %v1583
        %v1663 = vadd.f32 %v1507, %v1586
        %v1664 = vadd.f32 %v1508, %v1589
        %v1665 = vadd.f32 %v1509, %v1592
        %v1666 = vadd.f32 %v1510, %v1595
        %v1667 = vadd.f32 %v1511, %v1598
        %v1668 = vadd.f32 %v1512, %v1601
        %v1669 = vadd.f32 %v1513, %v1604
        %v1670 = vadd.f32 %v1514, %v1607
        %v1671 = vadd.f32 %v1515, %v1610
        %v1672 = vadd.f32 %v1516, %v1613
        %v1673 = vadd.f32 %v1517, %v1616
        %v1674 = vadd.f32 %v1518, %v1619
        %v1675 = vadd.f32 %v1519, %v1622
        %v1676 = vadd.f32 %v1520, %v1625
        %v1677 = vadd.f32 %v1521, %v1628
        %v1678 = vadd.f32 %v1522, %v1631
        %v1679 = vadd.f32 %v1523, %v1634
        %v1680 = vadd.f32 %v1524, %v1637
        %v1681 = vadd.f32 %v1525, %v1640
        %v1682 = vadd.f32 %v1526, %v1643
        %v1683 = vadd.f32 %v1527, %v1646
        %v1684 = vadd.f32 %v1528, %v1649
        %v1685 = vadd.f32 %v1529, %v1652
        %v1687 = vrot.slane %v263, 1
        %v1688 = vrot.slane %v264, 1
        %v1689 = vsel %vm315, %v1687, %v1688
        %v1690 = vrot.slane %v265, 1
        %v1691 = vsel %vm315, %v1688, %v1690
        %s1692 = scalar_lea.vmem %s1, 28
        %v1693 = vld [vmem:[%s1692] sm:$0xf]
        %v1694 = vsel %vm398, %v1689, 0
        %v1696 = vsel %vm398, %v1691, 0
        %v1699 = vsel %vm463, %v1693, 0
        %1701 = vmatpush.msra.mxu0 0.0
        %1702 = vmatpush.msra.mxu0 0.0
        %1703 = vmatpush.msra.mxu0 0.0
        %1704 = vmatpush.msra.mxu0 0.0
        %1705 = vmatpush.msra.mxu0 0.0
        %1706 = vmatpush.msra.mxu0 0.0
        %1707 = vmatpush.msra.mxu0 0.0
        %1708 = vmatpush.msra.mxu0 0.0
        %1709 = vmatpush.msra.mxu0 0.0
        %1710 = vmatpush.msra.mxu0 0.0
        %1711 = vmatpush.msra.mxu0 0.0
        %1712 = vmatpush.msra.mxu0 0.0
        %1713 = vmatpush.msra.mxu0 0.0
        %1714 = vmatpush.msra.mxu0 0.0
        %1715 = vmatpush.msra.mxu0 0.0
        %1716 = vmatpush.msra.mxu0 %v1699
        %1717 = vmatmul.f32.gmra.mxu0 %v407
        %v1718 = vpop.f32.mrf.mxu0
        %v1719 = vadd.f32 0.0, %v1718
        %1720 = vmatmul.f32.gmra.mxu0 %v409
        %v1721 = vpop.f32.mrf.mxu0
        %v1722 = vadd.f32 0.0, %v1721
        %1723 = vmatmul.f32.gmra.mxu0 %v411
        %v1724 = vpop.f32.mrf.mxu0
        %v1725 = vadd.f32 0.0, %v1724
        %1726 = vmatmul.f32.gmra.mxu0 %v413
        %v1727 = vpop.f32.mrf.mxu0
        %v1728 = vadd.f32 0.0, %v1727
        %1729 = vmatmul.f32.gmra.mxu0 %v415
        %v1730 = vpop.f32.mrf.mxu0
        %v1731 = vadd.f32 0.0, %v1730
        %1732 = vmatmul.f32.gmra.mxu0 %v417
        %v1733 = vpop.f32.mrf.mxu0
        %v1734 = vadd.f32 0.0, %v1733
        %1735 = vmatmul.f32.gmra.mxu0 %v419
        %v1736 = vpop.f32.mrf.mxu0
        %v1737 = vadd.f32 0.0, %v1736
        %1738 = vmatmul.f32.gmra.mxu0 %v421
        %v1739 = vpop.f32.mrf.mxu0
        %v1740 = vadd.f32 0.0, %v1739
        %1741 = vmatmul.f32.gmra.mxu0 %v423
        %v1742 = vpop.f32.mrf.mxu0
        %v1743 = vadd.f32 0.0, %v1742
        %1744 = vmatmul.f32.gmra.mxu0 %v425
        %v1745 = vpop.f32.mrf.mxu0
        %v1746 = vadd.f32 0.0, %v1745
        %1747 = vmatmul.f32.gmra.mxu0 %v427
        %v1748 = vpop.f32.mrf.mxu0
        %v1749 = vadd.f32 0.0, %v1748
        %1750 = vmatmul.f32.gmra.mxu0 %v429
        %v1751 = vpop.f32.mrf.mxu0
        %v1752 = vadd.f32 0.0, %v1751
        %1753 = vmatmul.f32.gmra.mxu0 %v431
        %v1754 = vpop.f32.mrf.mxu0
        %v1755 = vadd.f32 0.0, %v1754
        %1756 = vmatmul.f32.gmra.mxu0 %v433
        %v1757 = vpop.f32.mrf.mxu0
        %v1758 = vadd.f32 0.0, %v1757
        %1759 = vmatmul.f32.gmra.mxu0 %v435
        %v1760 = vpop.f32.mrf.mxu0
        %v1761 = vadd.f32 0.0, %v1760
        %1762 = vmatmul.f32.gmra.mxu0 %v437
        %v1763 = vpop.f32.mrf.mxu0
        %v1764 = vadd.f32 0.0, %v1763
        %1765 = vmatmul.f32.gmra.mxu0 %v439
        %v1766 = vpop.f32.mrf.mxu0
        %v1767 = vadd.f32 0.0, %v1766
        %1768 = vmatmul.f32.gmra.mxu0 %v441
        %v1769 = vpop.f32.mrf.mxu0
        %v1770 = vadd.f32 0.0, %v1769
        %1771 = vmatmul.f32.gmra.mxu0 %v443
        %v1772 = vpop.f32.mrf.mxu0
        %v1773 = vadd.f32 0.0, %v1772
        %1774 = vmatmul.f32.gmra.mxu0 %v445
        %v1775 = vpop.f32.mrf.mxu0
        %v1776 = vadd.f32 0.0, %v1775
        %1777 = vmatmul.f32.gmra.mxu0 %v447
        %v1778 = vpop.f32.mrf.mxu0
        %v1779 = vadd.f32 0.0, %v1778
        %1780 = vmatmul.f32.gmra.mxu0 %v449
        %v1781 = vpop.f32.mrf.mxu0
        %v1782 = vadd.f32 0.0, %v1781
        %1783 = vmatmul.f32.gmra.mxu0 %v451
        %v1784 = vpop.f32.mrf.mxu0
        %v1785 = vadd.f32 0.0, %v1784
        %1786 = vmatmul.f32.gmra.mxu0 %v453
        %v1787 = vpop.f32.mrf.mxu0
        %v1788 = vadd.f32 0.0, %v1787
        %1789 = vmatmul.f32.gmra.mxu0 %v455
        %v1790 = vpop.f32.mrf.mxu0
        %v1791 = vadd.f32 0.0, %v1790
        %1792 = vmatmul.f32.gmra.mxu0 %v457
        %v1793 = vpop.f32.mrf.mxu0
        %v1794 = vadd.f32 0.0, %v1793
        %1795 = vmatmul.f32.gmra.mxu0 %v459
        %v1796 = vpop.f32.mrf.mxu0
        %v1797 = vadd.f32 0.0, %v1796
        %1798 = vmatmul.f32.gmra.mxu0 %v461
        %v1799 = vpop.f32.mrf.mxu0
        %v1800 = vadd.f32 0.0, %v1799
        %1801 = vmatmul.f32.gmra.mxu0 %v1219
        %v1802 = vpop.f32.mrf.mxu0
        %v1803 = vadd.f32 0.0, %v1802
        %1804 = vmatmul.f32.gmra.mxu0 %v1221
        %v1805 = vpop.f32.mrf.mxu0
        %v1806 = vadd.f32 0.0, %v1805
        %1807 = vmatmul.f32.gmra.mxu0 %v1694
        %v1808 = vpop.f32.mrf.mxu0
        %v1809 = vadd.f32 0.0, %v1808
        %1810 = vmatmul.f32.gmra.mxu0 %v1696
        %v1811 = vpop.f32.mrf.mxu0
        %v1812 = vadd.f32 0.0, %v1811
        %1813 = vdwg.mxu0
        %v1814 = vadd.f32 %v1654, %v1719
        %v1815 = vadd.f32 %v1655, %v1722
        %v1816 = vadd.f32 %v1656, %v1725
        %v1817 = vadd.f32 %v1657, %v1728
        %v1818 = vadd.f32 %v1658, %v1731
        %v1819 = vadd.f32 %v1659, %v1734
        %v1820 = vadd.f32 %v1660, %v1737
        %v1821 = vadd.f32 %v1661, %v1740
        %v1822 = vadd.f32 %v1662, %v1743
        %v1823 = vadd.f32 %v1663, %v1746
        %v1824 = vadd.f32 %v1664, %v1749
        %v1825 = vadd.f32 %v1665, %v1752
        %v1826 = vadd.f32 %v1666, %v1755
        %v1827 = vadd.f32 %v1667, %v1758
        %v1828 = vadd.f32 %v1668, %v1761
        %v1829 = vadd.f32 %v1669, %v1764
        %v1830 = vadd.f32 %v1670, %v1767
        %v1831 = vadd.f32 %v1671, %v1770
        %v1832 = vadd.f32 %v1672, %v1773
        %v1833 = vadd.f32 %v1673, %v1776
        %v1834 = vadd.f32 %v1674, %v1779
        %v1835 = vadd.f32 %v1675, %v1782
        %v1836 = vadd.f32 %v1676, %v1785
        %v1837 = vadd.f32 %v1677, %v1788
        %v1838 = vadd.f32 %v1678, %v1791
        %v1839 = vadd.f32 %v1679, %v1794
        %v1840 = vadd.f32 %v1680, %v1797
        %v1841 = vadd.f32 %v1681, %v1800
        %v1842 = vadd.f32 %v1682, %v1803
        %v1843 = vadd.f32 %v1683, %v1806
        %v1844 = vadd.f32 %v1684, %v1809
        %v1845 = vadd.f32 %v1685, %v1812
        %v1846 = vrot.slane %v263, 2
        %v1847 = vrot.slane %v264, 2
        %v1848 = vsel %vm760, %v1846, %v1847
        %v1849 = vrot.slane %v265, 2
        %v1850 = vsel %vm760, %v1847, %v1849
        %s1851 = scalar_lea.vmem %s1, 32
        %v1852 = vld [vmem:[%s1851] sm:$0xf]
        %v1853 = vsel %vm398, %v1848, 0
        %v1855 = vsel %vm398, %v1850, 0
        %v1858 = vsel %vm463, %v1852, 0
        %1860 = vmatpush.msra.mxu0 0.0
        %1861 = vmatpush.msra.mxu0 0.0
        %1862 = vmatpush.msra.mxu0 0.0
        %1863 = vmatpush.msra.mxu0 0.0
        %1864 = vmatpush.msra.mxu0 0.0
        %1865 = vmatpush.msra.mxu0 0.0
        %1866 = vmatpush.msra.mxu0 0.0
        %1867 = vmatpush.msra.mxu0 0.0
        %1868 = vmatpush.msra.mxu0 0.0
        %1869 = vmatpush.msra.mxu0 0.0
        %1870 = vmatpush.msra.mxu0 0.0
        %1871 = vmatpush.msra.mxu0 0.0
        %1872 = vmatpush.msra.mxu0 0.0
        %1873 = vmatpush.msra.mxu0 0.0
        %1874 = vmatpush.msra.mxu0 0.0
        %1875 = vmatpush.msra.mxu0 %v1858
        %1876 = vmatmul.f32.gmra.mxu0 %v851
        %v1877 = vpop.f32.mrf.mxu0
        %v1878 = vadd.f32 0.0, %v1877
        %1879 = vmatmul.f32.gmra.mxu0 %v853
        %v1880 = vpop.f32.mrf.mxu0
        %v1881 = vadd.f32 0.0, %v1880
        %1882 = vmatmul.f32.gmra.mxu0 %v855
        %v1883 = vpop.f32.mrf.mxu0
        %v1884 = vadd.f32 0.0, %v1883
        %1885 = vmatmul.f32.gmra.mxu0 %v857
        %v1886 = vpop.f32.mrf.mxu0
        %v1887 = vadd.f32 0.0, %v1886
        %1888 = vmatmul.f32.gmra.mxu0 %v859
        %v1889 = vpop.f32.mrf.mxu0
        %v1890 = vadd.f32 0.0, %v1889
        %1891 = vmatmul.f32.gmra.mxu0 %v861
        %v1892 = vpop.f32.mrf.mxu0
        %v1893 = vadd.f32 0.0, %v1892
        %1894 = vmatmul.f32.gmra.mxu0 %v863
        %v1895 = vpop.f32.mrf.mxu0
        %v1896 = vadd.f32 0.0, %v1895
        %1897 = vmatmul.f32.gmra.mxu0 %v865
        %v1898 = vpop.f32.mrf.mxu0
        %v1899 = vadd.f32 0.0, %v1898
        %1900 = vmatmul.f32.gmra.mxu0 %v867
        %v1901 = vpop.f32.mrf.mxu0
        %v1902 = vadd.f32 0.0, %v1901
        %1903 = vmatmul.f32.gmra.mxu0 %v869
        %v1904 = vpop.f32.mrf.mxu0
        %v1905 = vadd.f32 0.0, %v1904
        %1906 = vmatmul.f32.gmra.mxu0 %v871
        %v1907 = vpop.f32.mrf.mxu0
        %v1908 = vadd.f32 0.0, %v1907
        %1909 = vmatmul.f32.gmra.mxu0 %v873
        %v1910 = vpop.f32.mrf.mxu0
        %v1911 = vadd.f32 0.0, %v1910
        %1912 = vmatmul.f32.gmra.mxu0 %v875
        %v1913 = vpop.f32.mrf.mxu0
        %v1914 = vadd.f32 0.0, %v1913
        %1915 = vmatmul.f32.gmra.mxu0 %v877
        %v1916 = vpop.f32.mrf.mxu0
        %v1917 = vadd.f32 0.0, %v1916
        %1918 = vmatmul.f32.gmra.mxu0 %v879
        %v1919 = vpop.f32.mrf.mxu0
        %v1920 = vadd.f32 0.0, %v1919
        %1921 = vmatmul.f32.gmra.mxu0 %v881
        %v1922 = vpop.f32.mrf.mxu0
        %v1923 = vadd.f32 0.0, %v1922
        %1924 = vmatmul.f32.gmra.mxu0 %v883
        %v1925 = vpop.f32.mrf.mxu0
        %v1926 = vadd.f32 0.0, %v1925
        %1927 = vmatmul.f32.gmra.mxu0 %v885
        %v1928 = vpop.f32.mrf.mxu0
        %v1929 = vadd.f32 0.0, %v1928
        %1930 = vmatmul.f32.gmra.mxu0 %v887
        %v1931 = vpop.f32.mrf.mxu0
        %v1932 = vadd.f32 0.0, %v1931
        %1933 = vmatmul.f32.gmra.mxu0 %v889
        %v1934 = vpop.f32.mrf.mxu0
        %v1935 = vadd.f32 0.0, %v1934
        %1936 = vmatmul.f32.gmra.mxu0 %v891
        %v1937 = vpop.f32.mrf.mxu0
        %v1938 = vadd.f32 0.0, %v1937
        %1939 = vmatmul.f32.gmra.mxu0 %v893
        %v1940 = vpop.f32.mrf.mxu0
        %v1941 = vadd.f32 0.0, %v1940
        %1942 = vmatmul.f32.gmra.mxu0 %v895
        %v1943 = vpop.f32.mrf.mxu0
        %v1944 = vadd.f32 0.0, %v1943
        %1945 = vmatmul.f32.gmra.mxu0 %v897
        %v1946 = vpop.f32.mrf.mxu0
        %v1947 = vadd.f32 0.0, %v1946
        %1948 = vmatmul.f32.gmra.mxu0 %v899
        %v1949 = vpop.f32.mrf.mxu0
        %v1950 = vadd.f32 0.0, %v1949
        %1951 = vmatmul.f32.gmra.mxu0 %v901
        %v1952 = vpop.f32.mrf.mxu0
        %v1953 = vadd.f32 0.0, %v1952
        %1954 = vmatmul.f32.gmra.mxu0 %v903
        %v1955 = vpop.f32.mrf.mxu0
        %v1956 = vadd.f32 0.0, %v1955
        %1957 = vmatmul.f32.gmra.mxu0 %v905
        %v1958 = vpop.f32.mrf.mxu0
        %v1959 = vadd.f32 0.0, %v1958
        %1960 = vmatmul.f32.gmra.mxu0 %v1378
        %v1961 = vpop.f32.mrf.mxu0
        %v1962 = vadd.f32 0.0, %v1961
        %1963 = vmatmul.f32.gmra.mxu0 %v1380
        %v1964 = vpop.f32.mrf.mxu0
        %v1965 = vadd.f32 0.0, %v1964
        %1966 = vmatmul.f32.gmra.mxu0 %v1853
        %v1967 = vpop.f32.mrf.mxu0
        %v1968 = vadd.f32 0.0, %v1967
        %1969 = vmatmul.f32.gmra.mxu0 %v1855
        %v1970 = vpop.f32.mrf.mxu0
        %v1971 = vadd.f32 0.0, %v1970
        %1972 = vdwg.mxu0
        %v1973 = vadd.f32 %v1814, %v1878
        %v1974 = vadd.f32 %v1815, %v1881
        %v1975 = vadd.f32 %v1816, %v1884
        %v1976 = vadd.f32 %v1817, %v1887
        %v1977 = vadd.f32 %v1818, %v1890
        %v1978 = vadd.f32 %v1819, %v1893
        %v1979 = vadd.f32 %v1820, %v1896
        %v1980 = vadd.f32 %v1821, %v1899
        %v1981 = vadd.f32 %v1822, %v1902
        %v1982 = vadd.f32 %v1823, %v1905
        %v1983 = vadd.f32 %v1824, %v1908
        %v1984 = vadd.f32 %v1825, %v1911
        %v1985 = vadd.f32 %v1826, %v1914
        %v1986 = vadd.f32 %v1827, %v1917
        %v1987 = vadd.f32 %v1828, %v1920
        %v1988 = vadd.f32 %v1829, %v1923
        %v1989 = vadd.f32 %v1830, %v1926
        %v1990 = vadd.f32 %v1831, %v1929
        %v1991 = vadd.f32 %v1832, %v1932
        %v1992 = vadd.f32 %v1833, %v1935
        %v1993 = vadd.f32 %v1834, %v1938
        %v1994 = vadd.f32 %v1835, %v1941
        %v1995 = vadd.f32 %v1836, %v1944
        %v1996 = vadd.f32 %v1837, %v1947
        %v1997 = vadd.f32 %v1838, %v1950
        %v1998 = vadd.f32 %v1839, %v1953
        %v1999 = vadd.f32 %v1840, %v1956
        %v2000 = vadd.f32 %v1841, %v1959
        %v2001 = vadd.f32 %v1842, %v1962
        %v2002 = vadd.f32 %v1843, %v1965
        %v2003 = vadd.f32 %v1844, %v1968
        %v2004 = vadd.f32 %v1845, %v1971
        %2005 = vst [vmem:[%s194] sm:$0xff] %v1973
        %2006 = vst [vmem:[%s194 + $0x8] sm:$0xff] %v1974
        %2007 = vst [vmem:[%s194 + $0x10] sm:$0xff] %v1975
        %2008 = vst [vmem:[%s194 + $0x18] sm:$0xff] %v1976
        %2009 = vst [vmem:[%s194 + $0x20] sm:$0xff] %v1977
        %2010 = vst [vmem:[%s194 + $0x28] sm:$0xff] %v1978
        %2011 = vst [vmem:[%s194 + $0x30] sm:$0xff] %v1979
        %2012 = vst [vmem:[%s194 + $0x38] sm:$0xff] %v1980
        %2013 = vst [vmem:[%s194 + $0x40] sm:$0xff] %v1981
        %2014 = vst [vmem:[%s194 + $0x48] sm:$0xff] %v1982
        %2015 = vst [vmem:[%s194 + $0x50] sm:$0xff] %v1983
        %2016 = vst [vmem:[%s194 + $0x58] sm:$0xff] %v1984
        %2017 = vst [vmem:[%s194 + $0x60] sm:$0xff] %v1985
        %2018 = vst [vmem:[%s194 + $0x68] sm:$0xff] %v1986
        %2019 = vst [vmem:[%s194 + $0x70] sm:$0xff] %v1987
        %2020 = vst [vmem:[%s194 + $0x78] sm:$0xff] %v1988
        %2021 = vst [vmem:[%s194 + $0x80] sm:$0xff] %v1989
        %2022 = vst [vmem:[%s194 + $0x88] sm:$0xff] %v1990
        %2023 = vst [vmem:[%s194 + $0x90] sm:$0xff] %v1991
        %2024 = vst [vmem:[%s194 + $0x98] sm:$0xff] %v1992
        %2025 = vst [vmem:[%s194 + $0xa0] sm:$0xff] %v1993
        %2026 = vst [vmem:[%s194 + $0xa8] sm:$0xff] %v1994
        %2027 = vst [vmem:[%s194 + $0xb0] sm:$0xff] %v1995
        %2028 = vst [vmem:[%s194 + $0xb8] sm:$0xff] %v1996
        %2029 = vst [vmem:[%s194 + $0xc0] sm:$0xff] %v1997
        %2030 = vst [vmem:[%s194 + $0xc8] sm:$0xff] %v1998
        %2031 = vst [vmem:[%s194 + $0xd0] sm:$0xff] %v1999
        %2032 = vst [vmem:[%s194 + $0xd8] sm:$0xff] %v2000
        %2033 = vst [vmem:[%s194 + $0xe0] sm:$0xff] %v2001
        %2034 = vst [vmem:[%s194 + $0xe8] sm:$0xff] %v2002
        %2035 = vst [vmem:[%s194 + $0xf0] sm:$0xff] %v2003
        %2036 = vst [vmem:[%s194 + $0xf8] sm:$0xff] %v2004
        %v2037 = vadd.f32 %v1973, %v1974
        %v2038 = vadd.f32 %v2037, %v1975
        %v2039 = vadd.f32 %v2038, %v1976
        %v2040 = vadd.f32 %v2039, %v1977
        %v2041 = vadd.f32 %v2040, %v1978
        %v2042 = vadd.f32 %v2041, %v1979
        %v2043 = vadd.f32 %v2042, %v1980
        %v2044 = vadd.f32 %v2043, %v1981
        %v2045 = vadd.f32 %v2044, %v1982
        %v2046 = vadd.f32 %v2045, %v1983
        %v2047 = vadd.f32 %v2046, %v1984
        %v2048 = vadd.f32 %v2047, %v1985
        %v2049 = vadd.f32 %v2048, %v1986
        %v2050 = vadd.f32 %v2049, %v1987
        %v2051 = vadd.f32 %v2050, %v1988
        %v2052 = vadd.f32 %v2051, %v1989
        %v2053 = vadd.f32 %v2052, %v1990
        %v2054 = vadd.f32 %v2053, %v1991
        %v2055 = vadd.f32 %v2054, %v1992
        %v2056 = vadd.f32 %v2055, %v1993
        %v2057 = vadd.f32 %v2056, %v1994
        %v2058 = vadd.f32 %v2057, %v1995
        %v2059 = vadd.f32 %v2058, %v1996
        %v2060 = vadd.f32 %v2059, %v1997
        %v2061 = vadd.f32 %v2060, %v1998
        %v2062 = vadd.f32 %v2061, %v1999
        %v2063 = vadd.f32 %v2062, %v2000
        %v2064 = vadd.f32 %v2063, %v2001
        %v2065 = vadd.f32 %v2064, %v2002
        %v2066 = vadd.f32 %v2065, %v2003
        %v2067 = vadd.f32 %v2066, %v2004
        %v2068 = vrot.slane %v2067, 4
        %v2069 = vadd.f32 %v2067, %v2068
        %v2070 = vrot.slane %v2069, 2
        %v2071 = vadd.f32 %v2069, %v2070
        %v2072 = vrot.slane %v2071, 1
        %v2073 = vadd.f32 %v2071, %v2072
        %2074 = vst [vmem:[%s200] sm:$0x1] %v2073
        %v2075 = vmul.f32 %v1973, %v1973
        %v2076 = vmul.f32 %v1974, %v1974
        %v2077 = vmul.f32 %v1975, %v1975
        %v2078 = vmul.f32 %v1976, %v1976
        %v2079 = vmul.f32 %v1977, %v1977
        %v2080 = vmul.f32 %v1978, %v1978
        %v2081 = vmul.f32 %v1979, %v1979
        %v2082 = vmul.f32 %v1980, %v1980
        %v2083 = vmul.f32 %v1981, %v1981
        %v2084 = vmul.f32 %v1982, %v1982
        %v2085 = vmul.f32 %v1983, %v1983
        %v2086 = vmul.f32 %v1984, %v1984
        %v2087 = vmul.f32 %v1985, %v1985
        %v2088 = vmul.f32 %v1986, %v1986
        %v2089 = vmul.f32 %v1987, %v1987
        %v2090 = vmul.f32 %v1988, %v1988
        %v2091 = vmul.f32 %v1989, %v1989
        %v2092 = vmul.f32 %v1990, %v1990
        %v2093 = vmul.f32 %v1991, %v1991
        %v2094 = vmul.f32 %v1992, %v1992
        %v2095 = vmul.f32 %v1993, %v1993
        %v2096 = vmul.f32 %v1994, %v1994
        %v2097 = vmul.f32 %v1995, %v1995
        %v2098 = vmul.f32 %v1996, %v1996
        %v2099 = vmul.f32 %v1997, %v1997
        %v2100 = vmul.f32 %v1998, %v1998
        %v2101 = vmul.f32 %v1999, %v1999
        %v2102 = vmul.f32 %v2000, %v2000
        %v2103 = vmul.f32 %v2001, %v2001
        %v2104 = vmul.f32 %v2002, %v2002
        %v2105 = vmul.f32 %v2003, %v2003
        %v2106 = vmul.f32 %v2004, %v2004
        %v2107 = vadd.f32 %v2075, %v2076
        %v2108 = vadd.f32 %v2107, %v2077
        %v2109 = vadd.f32 %v2108, %v2078
        %v2110 = vadd.f32 %v2109, %v2079
        %v2111 = vadd.f32 %v2110, %v2080
        %v2112 = vadd.f32 %v2111, %v2081
        %v2113 = vadd.f32 %v2112, %v2082
        %v2114 = vadd.f32 %v2113, %v2083
        %v2115 = vadd.f32 %v2114, %v2084
        %v2116 = vadd.f32 %v2115, %v2085
        %v2117 = vadd.f32 %v2116, %v2086
        %v2118 = vadd.f32 %v2117, %v2087
        %v2119 = vadd.f32 %v2118, %v2088
        %v2120 = vadd.f32 %v2119, %v2089
        %v2121 = vadd.f32 %v2120, %v2090
        %v2122 = vadd.f32 %v2121, %v2091
        %v2123 = vadd.f32 %v2122, %v2092
        %v2124 = vadd.f32 %v2123, %v2093
        %v2125 = vadd.f32 %v2124, %v2094
        %v2126 = vadd.f32 %v2125, %v2095
        %v2127 = vadd.f32 %v2126, %v2096
        %v2128 = vadd.f32 %v2127, %v2097
        %v2129 = vadd.f32 %v2128, %v2098
        %v2130 = vadd.f32 %v2129, %v2099
        %v2131 = vadd.f32 %v2130, %v2100
        %v2132 = vadd.f32 %v2131, %v2101
        %v2133 = vadd.f32 %v2132, %v2102
        %v2134 = vadd.f32 %v2133, %v2103
        %v2135 = vadd.f32 %v2134, %v2104
        %v2136 = vadd.f32 %v2135, %v2105
        %v2137 = vadd.f32 %v2136, %v2106
        %v2138 = vrot.slane %v2137, 4
        %v2139 = vadd.f32 %v2137, %v2138
        %v2140 = vrot.slane %v2139, 2
        %v2141 = vadd.f32 %v2139, %v2140
        %v2142 = vrot.slane %v2141, 1
        %v2143 = vadd.f32 %v2141, %v2142
        %2144 = vst [vmem:[%s206] sm:$0x1] %v2143
        %s2145 = sand.u32 %s77, 1
        %s2146 = scalar_lea.sflag [#allocation3], %s2145
        %s2147 = sand.u32 %s77, 1
        %s2148 = smul.addr %s2147, 256
        %s2149 = scalar_lea.vmem [#allocation2], %s2148
        %s2150 = sand.u32 %s22, 1
        %s2151 = scalar_lea.sflag [#allocation5], %s2150
        %s2152 = sand.u32 %s103, 1
        %s2153 = scalar_lea.vmem [#allocation4], %s2152
        %s2154 = sand.u32 %s22, 1
        %s2155 = scalar_lea.sflag [#allocation5], %s2154
        %s2156 = sand.u32 %s129, 1
        %s2157 = scalar_lea.vmem [#allocation6], %s2156
        // Predicated region
        $region29: #{tpu_custom_call.1} parent=27 // pred_check
          %p2158 = pneg %p87
        $region30: #{tpu_custom_call.1} parent=27 // pred_check_branch
          %2160 = sbr.rel (%p2158) target = $region32
        $region31: #{tpu_custom_call.1} parent=27 // pred_region
          %2162 = vsyncadd %s2146, 0
          %s2163 = smul.addr %s22, 32
          %s2164 = smul.addr %s2163, 8
          %s2165 = scalar_lea.hbm %s2, %s2164
          %s2166 = sshll.u32 %s2149, 4
          %s2167 = int_to_ptr.vmem [resolvable:$true] %s2166
          %s2168 = sshll.u32 %s2165, 4
          %s2169 = int_to_ptr.hbm [resolvable:$true] %s2168
          %2174 = dma.vmem_to_hbm [thread:$0]  %s2167, 4096, %s2169, %s2146, 128, 128, 8
        $region32: #{tpu_custom_call.1} parent=27 // pred_fallthru
          _
        // Predicated region
        $region33: #{tpu_custom_call.1} parent=27 // pred_check
          %p2175 = pneg %p113
        $region34: #{tpu_custom_call.1} parent=27 // pred_check_branch
          %2177 = sbr.rel (%p2175) target = $region36
        $region35: #{tpu_custom_call.1} parent=27 // pred_region
          %2179 = vsyncadd %s2151, 0
          %s2180 = scalar_lea.hbm %s3, %s22
          %s2182 = sshll.u32 %s2153, 4
          %s2183 = int_to_ptr.vmem [resolvable:$true] %s2182
          %s2184 = sshll.u32 %s2180, 4
          %s2185 = int_to_ptr.hbm [resolvable:$true] %s2184
          %2187 = dma.vmem_to_hbm [thread:$0]  %s2183, 16, %s2185, %s2151
        $region36: #{tpu_custom_call.1} parent=27 // pred_fallthru
          _
        // Predicated region
        $region37: #{tpu_custom_call.1} parent=27 // pred_check
          %p2188 = pneg %p139
        $region38: #{tpu_custom_call.1} parent=27 // pred_check_branch
          %2190 = sbr.rel (%p2188) target = $region40
        $region39: #{tpu_custom_call.1} parent=27 // pred_region
          %2192 = vsyncadd %s2155, 0
          %s2193 = scalar_lea.hbm %s4, %s22
          %s2195 = sshll.u32 %s2157, 4
          %s2196 = int_to_ptr.vmem [resolvable:$true] %s2195
          %s2197 = sshll.u32 %s2193, 4
          %s2198 = int_to_ptr.hbm [resolvable:$true] %s2197
          %2200 = dma.vmem_to_hbm [thread:$0]  %s2196, 16, %s2198, %s2155
        $region40: #{tpu_custom_call.1} parent=27 // pred_fallthru
          _
      $region28: #{tpu_custom_call.1} parent=5 // pred_fallthru
        _
      %p2201 = scmp.le.s32.totalorder 2, %s17
      // Predicated region
      $region41: #{tpu_custom_call.1} parent=5 // pred_check
        %p2202 = pneg %p2201
      $region42: #{tpu_custom_call.1} parent=5 // pred_check_branch
        %2204 = sbr.rel (%p2202) target = $region44
      $region43: #{tpu_custom_call.1} parent=5 // pred_region
        %s2205 = ssub.s32 %s17, 2
        // Predicated region
        $region45: #{tpu_custom_call.1} parent=43 // pred_check
          %p2206 = pneg %p93
        $region46: #{tpu_custom_call.1} parent=43 // pred_check_branch
          %2208 = sbr.rel (%p2206) target = $region48
        $region47: #{tpu_custom_call.1} parent=43 // pred_region
          %s2209 = sand.u32 %s78, 1
          %s2210 = scalar_lea.sflag [#allocation3], %s2209
          %s2211 = sand.u32 %s78, 1
          %s2212 = smul.addr %s2211, 256
          %s2213 = scalar_lea.vmem [#allocation2], %s2212
          %2215 = dma.done %s2210, 4096
        $region48: #{tpu_custom_call.1} parent=43 // pred_fallthru
          _
        // Predicated region
        $region49: #{tpu_custom_call.1} parent=43 // pred_check
          %p2216 = pneg %p119
        $region50: #{tpu_custom_call.1} parent=43 // pred_check_branch
          %2218 = sbr.rel (%p2216) target = $region52
        $region51: #{tpu_custom_call.1} parent=43 // pred_region
          %s2219 = sand.u32 %s23, 1
          %s2220 = scalar_lea.sflag [#allocation5], %s2219
          %s2221 = sand.u32 %s104, 1
          %s2222 = scalar_lea.vmem [#allocation4], %s2221
          %2224 = dma.done %s2220, 16
        $region52: #{tpu_custom_call.1} parent=43 // pred_fallthru
          _
        // Predicated region
        $region53: #{tpu_custom_call.1} parent=43 // pred_check
          %p2225 = pneg %p145
        $region54: #{tpu_custom_call.1} parent=43 // pred_check_branch
          %2227 = sbr.rel (%p2225) target = $region56
        $region55: #{tpu_custom_call.1} parent=43 // pred_region
          %s2228 = sand.u32 %s23, 1
          %s2229 = scalar_lea.sflag [#allocation5], %s2228
          %s2230 = sand.u32 %s130, 1
          %s2231 = scalar_lea.vmem [#allocation6], %s2230
          %2233 = dma.done %s2229, 16
        $region56: #{tpu_custom_call.1} parent=43 // pred_fallthru
          _
      $region44: #{tpu_custom_call.1} parent=5 // pred_fallthru
        _
    $region6: #{tpu_custom_call.1} parent=1 // loop_footer
      %s21 = sadd.s32 1, %s17
    $region7: #{tpu_custom_call.1} parent=1 // loop_footer_branch
      %16 = sbr.rel target = $region3
    $region8: #{tpu_custom_call.1} parent=1 // loop_exit
      _
    %2234 = vsyncpa [#allocation3], 1
    %s2235 = scalar_lea.sflag [#allocation3], 1
    %2236 = vsyncpa %s2235, 1
    %2237 = vsyncpa [#allocation5], 1
    %s2238 = scalar_lea.sflag [#allocation5], 1
    %2239 = vsyncpa %s2238, 1

</llo_original>
